<compile_context>
chip_gen: v5e
topology: v5e:2x2
jax: 0.10.0
libtpu: 0.0.40
codegen_flags: <defaults>
</compile_context>

<pallas_src>
import functools

import jax
import jax.numpy as jnp
from jax.experimental import pallas as pl
from jax.experimental.pallas import tpu as pltpu

EPS = 1e-5
# Large-negative stand-in for -inf in the max-pool.  Safe because the 4
# unshifted (always-valid) phase taps are never masked, so the pool result is
# never NEG itself and is never squared before being validity-masked.
NEG = float(jnp.finfo(jnp.float32).min)


def _round_up(x, m):
    return (x + m - 1) // m * m


def _branch_chunk(xs_ref, w00, w01, w10, w11, ci, *, cin, ch, wo, howo, halo):
    """Conv (4 MXU dots) + masked max-pool for one statically indexed chunk.

    xs_ref: (4*cin, halo + n_chunks*ch) VMEM ref, phase order
            [(0,0), (0,1), (1,1), (1,0)], lanes = flattened (ho, wo) of one
            image with a zero left halo of `halo` lanes.
    Returns conv (cm, ch), pool (cin, ch), valid (1, ch) bool.
    """
    cin4 = 4 * cin
    col = halo + ci * ch                       # static python int

    # Tap groups as shifted contiguous lane windows of contiguous phase rows.
    x00 = xs_ref[:, pl.ds(col, ch)]                      # all phases, shift 0
    x01 = xs_ref[cin:3 * cin, pl.ds(col - 1, ch)]        # px==1 phases, shift 1
    x10 = xs_ref[2 * cin:cin4, pl.ds(col - wo, ch)]      # py==1 phases, shift Wo
    x11 = xs_ref[2 * cin:3 * cin, pl.ds(col - wo - 1, ch)]  # phase (1,1), Wo+1

    # Per-lane (ho, wo) border masks from an iota (exact float floor-divide;
    # quotient <= Ho so the 0.5 offset dominates the rounding error).
    li = jax.lax.broadcasted_iota(jnp.int32, (1, ch), 1) + (ci * ch)
    lf = li.astype(jnp.float32)
    hof = jnp.floor((lf + 0.5) * (1.0 / wo))
    wo0 = (lf - hof * wo) < 0.5                # wo == 0 -> left taps invalid
    ho0 = hof < 0.5                            # ho == 0 -> top  taps invalid
    corner = jnp.logical_or(ho0, wo0)
    valid = li < howo                          # lanes beyond Ho*Wo are padding

    # main branch: 3x3 stride-2 conv as four small matmuls (K = 4Cin..Cin).
    conv = jnp.dot(w00, x00, preferred_element_type=jnp.float32)
    conv = conv + jnp.where(wo0, 0.0,
                            jnp.dot(w01, x01, preferred_element_type=jnp.float32))
    conv = conv + jnp.where(ho0, 0.0,
                            jnp.dot(w10, x10, preferred_element_type=jnp.float32))
    conv = conv + jnp.where(corner, 0.0,
                            jnp.dot(w11, x11, preferred_element_type=jnp.float32))

    # ext branch: max-pool over the same 9 taps, per channel (phase blocks are
    # contiguous cin-row slabs -> block-wise maxima, masked taps -> NEG).
    p00 = jnp.maximum(jnp.maximum(x00[0:cin], x00[cin:2 * cin]),
                      jnp.maximum(x00[2 * cin:3 * cin], x00[3 * cin:cin4]))
    p01 = jnp.maximum(x01[0:cin], x01[cin:2 * cin])
    p10 = jnp.maximum(x10[0:cin], x10[cin:2 * cin])
    pool = p00
    pool = jnp.maximum(pool, jnp.where(wo0, NEG, p01))
    pool = jnp.maximum(pool, jnp.where(ho0, NEG, p10))
    pool = jnp.maximum(pool, jnp.where(corner, NEG, x11))

    return conv, pool, valid


def _stats_kernel(xs_ref, w00_ref, w01_ref, w10_ref, w11_ref, sum_ref, ssq_ref,
                  *, cin, cm, ch, n_chunks, wo, howo, halo):
    """Pass 1: per-image channel sum / sum-of-squares of (conv, pool)."""
    w00 = w00_ref[...]
    w01 = w01_ref[...]
    w10 = w10_ref[...]
    w11 = w11_ref[...]

    s_c = jnp.zeros((cm, 1), jnp.float32)
    s_p = jnp.zeros((cin, 1), jnp.float32)
    q_c = jnp.zeros((cm, 1), jnp.float32)
    q_p = jnp.zeros((cin, 1), jnp.float32)

    for ci in range(n_chunks):                 # statically unrolled
        conv, pool, valid = _branch_chunk(xs_ref, w00, w01, w10, w11, ci,
                                          cin=cin, ch=ch, wo=wo, howo=howo,
                                          halo=halo)
        conv = jnp.where(valid, conv, 0.0)     # padded lanes contribute nothing
        pool = jnp.where(valid, pool, 0.0)
        s_c = s_c + jnp.sum(conv, axis=1, keepdims=True)
        s_p = s_p + jnp.sum(pool, axis=1, keepdims=True)
        q_c = q_c + jnp.sum(conv * conv, axis=1, keepdims=True)
        q_p = q_p + jnp.sum(pool * pool, axis=1, keepdims=True)

    sum_ref[...] = jnp.concatenate([s_c, s_p], axis=0)
    ssq_ref[...] = jnp.concatenate([q_c, q_p], axis=0)


def _apply_kernel(xs_ref, w00_ref, w01_ref, w10_ref, w11_ref, scale_ref,
                  shift_ref, out_ref, *, cin, cm, ch, n_chunks, wo, howo, halo):
    """Pass 2: recompute conv+pool, apply folded BN scale/shift + ReLU."""
    w00 = w00_ref[...]
    w01 = w01_ref[...]
    w10 = w10_ref[...]
    w11 = w11_ref[...]
    sc_c = scale_ref[0:cm]
    sh_c = shift_ref[0:cm]
    sc_p = scale_ref[cm:cm + cin]
    sh_p = shift_ref[cm:cm + cin]

    for ci in range(n_chunks):                 # statically unrolled
        conv, pool, _ = _branch_chunk(xs_ref, w00, w01, w10, w11, ci,
                                      cin=cin, ch=ch, wo=wo, howo=howo,
                                      halo=halo)
        cols = pl.ds(ci * ch, ch)
        out_ref[0:cm, cols] = jnp.maximum(conv * sc_c + sh_c, 0.0)
        out_ref[cm:cm + cin, cols] = jnp.maximum(pool * sc_p + sh_p, 0.0)


def initial_block(x, w, gamma, beta, *, chunk=512):
    """x: (N, Cin, H, W) f32; w: (Cout-3, Cin, 3, 3); gamma/beta: (Cout,).
    Returns (N, Cout, H//2, W//2) f32 (training-mode BN + ReLU)."""
    N, Cin, H, W = x.shape
    assert H % 2 == 0 and W % 2 == 0  # TODO(synk): odd spatial sizes
    Cm = w.shape[0]
    Cout = Cm + Cin
    Ho, Wo = H // 2, W // 2
    HoWo = Ho * Wo
    R = N * HoWo

    CH = min(chunk, _round_up(HoWo, 128))      # in-kernel lane chunk
    HoWo_pad = _round_up(HoWo, CH)             # image lanes, padded to chunks
    n_chunks = HoWo_pad // CH
    HALO = _round_up(Wo + 1, 128)              # zero left halo for shifted reads
    W_all = HALO + HoWo_pad

    x = x.astype(jnp.float32)
    wf = w.astype(jnp.float32)

    # ---- wrapper-side layout plumbing (single space-to-depth + pad) ---------
    # xs[n, P*Cin + c, ho*Wo + wo] = x[n, c, 2*ho + py(P), 2*wo + px(P)]
    # phase order P: [(0,0), (0,1), (1,1), (1,0)] so that every tap group of
    # the 3x3/stride-2 window maps to a *contiguous* block of phase rows.
    xr = x.reshape(N, Cin, Ho, 2, Wo, 2)
    xs = jnp.transpose(xr, (0, 3, 5, 1, 2, 4))            # (N, py, px, C, Ho, Wo)
    xs = xs.reshape(N, 4, Cin, HoWo)
    xs = xs[:, jnp.array([0, 1, 3, 2]), :, :]             # reorder phases
    xs = xs.reshape(N, 4 * Cin, HoWo)
    xs = jnp.pad(xs, ((0, 0), (0, 0), (HALO, HoWo_pad - HoWo)))

    # Weights regrouped to match the phase-row layout of each tap group.
    w00 = jnp.concatenate([wf[:, :, 1, 1], wf[:, :, 1, 2],
                           wf[:, :, 2, 2], wf[:, :, 2, 1]], axis=1)  # (Cm, 4Cin)
    w01 = jnp.concatenate([wf[:, :, 1, 0], wf[:, :, 2, 0]], axis=1)  # (Cm, 2Cin)
    w10 = jnp.concatenate([wf[:, :, 0, 2], wf[:, :, 0, 1]], axis=1)  # (Cm, 2Cin)
    w11 = wf[:, :, 0, 0]                                             # (Cm, Cin)

    grid = (N,)
    cparams = pltpu.CompilerParams(
        dimension_semantics=("parallel",),
        vmem_limit_bytes=32 * 1024 * 1024,
    )

    xs_spec = pl.BlockSpec((None, 4 * Cin, W_all), lambda n: (n, 0, 0))
    w_specs = [
        pl.BlockSpec((Cm, 4 * Cin), lambda n: (0, 0)),
        pl.BlockSpec((Cm, 2 * Cin), lambda n: (0, 0)),
        pl.BlockSpec((Cm, 2 * Cin), lambda n: (0, 0)),
        pl.BlockSpec((Cm, Cin), lambda n: (0, 0)),
    ]

    # ---- pass 1: per-image channel sums / sums of squares -------------------
    kernel1 = functools.partial(_stats_kernel, cin=Cin, cm=Cm, ch=CH,
                                n_chunks=n_chunks, wo=Wo, howo=HoWo, halo=HALO)
    psum, pssq = pl.pallas_call(
        kernel1,
        grid=grid,
        in_specs=[xs_spec] + w_specs,
        out_specs=(
            pl.BlockSpec((None, Cout, 1), lambda n: (n, 0, 0)),
            pl.BlockSpec((None, Cout, 1), lambda n: (n, 0, 0)),
        ),
        out_shape=(
            jax.ShapeDtypeStruct((N, Cout, 1), jnp.float32),
            jax.ShapeDtypeStruct((N, Cout, 1), jnp.float32),
        ),
        compiler_params=cparams,
    )(xs, w00, w01, w10, w11)

    # Fold training-mode BN stats (biased variance) with gamma/beta (tiny math).
    total_s = jnp.sum(psum, axis=0)            # (Cout, 1)
    total_q = jnp.sum(pssq, axis=0)            # (Cout, 1)
    mean = total_s / R
    var = total_q / R - mean * mean
    inv = jax.lax.rsqrt(var + EPS)
    scale = gamma.reshape(Cout, 1).astype(jnp.float32) * inv
    shift = beta.reshape(Cout, 1).astype(jnp.float32) - mean * scale

    # ---- pass 2: recompute branches, apply BN + ReLU, write NCHW-flat -------
    kernel2 = functools.partial(_apply_kernel, cin=Cin, cm=Cm, ch=CH,
                                n_chunks=n_chunks, wo=Wo, howo=HoWo, halo=HALO)
    out = pl.pallas_call(
        kernel2,
        grid=grid,
        in_specs=[xs_spec] + w_specs + [
            pl.BlockSpec((Cout, 1), lambda n: (0, 0)),
            pl.BlockSpec((Cout, 1), lambda n: (0, 0)),
        ],
        out_specs=pl.BlockSpec((None, Cout, HoWo_pad), lambda n: (n, 0, 0)),
        out_shape=jax.ShapeDtypeStruct((N, Cout, HoWo_pad), jnp.float32),
        compiler_params=cparams,
    )(xs, w00, w01, w10, w11, scale, shift)

    return out[:, :, :HoWo].reshape(N, Cout, Ho, Wo)


def reference_initial_block(x, w, gamma, beta):
    """Pure-JAX reference matching the PyTorch forward (training-mode BN)."""
    main = jax.lax.conv_general_dilated(
        x, w, window_strides=(2, 2), padding=((1, 1), (1, 1)),
        dimension_numbers=("NCHW", "OIHW", "NCHW"))
    ext = jax.lax.reduce_window(
        x, -jnp.inf, jax.lax.max,
        window_dimensions=(1, 1, 3, 3), window_strides=(1, 1, 2, 2),
        padding=((0, 0), (0, 0), (1, 1), (1, 1)))
    out = jnp.concatenate([main, ext], axis=1)
    mean = jnp.mean(out, axis=(0, 2, 3), keepdims=True)
    var = jnp.mean((out - mean) ** 2, axis=(0, 2, 3), keepdims=True)
    out = (out - mean) * jax.lax.rsqrt(var + EPS)
    out = out * gamma.reshape(1, -1, 1, 1) + beta.reshape(1, -1, 1, 1)
    return jnp.maximum(out, 0.0)


if __name__ == "__main__":
    key = jax.random.PRNGKey(0)
    k_x, k_w, k_g, k_b = jax.random.split(key, 4)

    N, Cin, H, W = 2, 3, 16, 16          # ENet InitialBlock: in_channels=3
    Cout = 16                            # out_channels=16 -> conv makes 13 maps
    Cm = Cout - 3

    x = jax.random.normal(k_x, (N, Cin, H, W), dtype=jnp.float32)
    w = jax.random.normal(k_w, (Cm, Cin, 3, 3), dtype=jnp.float32) * 0.2
    gamma = 0.5 + jax.random.uniform(k_g, (Cout,), dtype=jnp.float32)
    beta = 0.1 * jax.random.normal(k_b, (Cout,), dtype=jnp.float32)

    fwd = jax.jit(initial_block)
    out = jax.block_until_ready(fwd(x, w, gamma, beta))
    ref = jax.block_until_ready(reference_initial_block(x, w, gamma, beta))

    assert out.shape == (N, Cout, H // 2, W // 2), out.shape
    err = float(jnp.max(jnp.abs(out - ref)))
    assert jnp.allclose(out, ref, atol=1e-3, rtol=1e-3), err
    print("KERNEL_OK")
</pallas_src>

<mosaic_0001>
module attributes {stable_mosaic.version = 11 : i64} {
  func.func @_stats_kernel(%arg0: i32, %arg1: memref<1x12x256xf32, #tpu.memory_space<vmem>>, %arg2: memref<13x12xf32, #tpu.memory_space<vmem>>, %arg3: memref<13x6xf32, #tpu.memory_space<vmem>>, %arg4: memref<13x6xf32, #tpu.memory_space<vmem>>, %arg5: memref<13x3xf32, #tpu.memory_space<vmem>>, %arg6: memref<1x16x1xf32, #tpu.memory_space<vmem>>, %arg7: memref<1x16x1xf32, #tpu.memory_space<vmem>>) attributes {dimension_semantics = [#tpu.dimension_semantics<parallel>], iteration_bounds = array<i64: 2>, scalar_prefetch = 0 : i64, scratch_operands = 0 : i64, tpu.core_type = #tpu.core_type<tc>, window_params = [{transform_indices = @transform_0, window_bounds = array<i64: 1, 12, 256>}, {pipeline_mode = #tpu.pipeline_mode<synchronous>, transform_indices = @transform_1, window_bounds = array<i64: 13, 12>}, {pipeline_mode = #tpu.pipeline_mode<synchronous>, transform_indices = @transform_2, window_bounds = array<i64: 13, 6>}, {pipeline_mode = #tpu.pipeline_mode<synchronous>, transform_indices = @transform_3, window_bounds = array<i64: 13, 6>}, {pipeline_mode = #tpu.pipeline_mode<synchronous>, transform_indices = @transform_4, window_bounds = array<i64: 13, 3>}, {transform_indices = @transform_5, window_bounds = array<i64: 1, 16, 1>}, {transform_indices = @transform_6, window_bounds = array<i64: 1, 16, 1>}]} {
    %c0 = arith.constant 0 : index
    %c0_0 = arith.constant 0 : index
    %0 = vector.load %arg2[%c0, %c0_0] : memref<13x12xf32, #tpu.memory_space<vmem>>, vector<13x12xf32>
    %c0_1 = arith.constant 0 : index
    %c0_2 = arith.constant 0 : index
    %1 = vector.load %arg3[%c0_1, %c0_2] : memref<13x6xf32, #tpu.memory_space<vmem>>, vector<13x6xf32>
    %c0_3 = arith.constant 0 : index
    %c0_4 = arith.constant 0 : index
    %2 = vector.load %arg4[%c0_3, %c0_4] : memref<13x6xf32, #tpu.memory_space<vmem>>, vector<13x6xf32>
    %c0_5 = arith.constant 0 : index
    %c0_6 = arith.constant 0 : index
    %3 = vector.load %arg5[%c0_5, %c0_6] : memref<13x3xf32, #tpu.memory_space<vmem>>, vector<13x3xf32>
    %cst = arith.constant 0.000000e+00 : f32
    %4 = vector.broadcast %cst : f32 to vector<13x1xf32>
    %cst_7 = arith.constant 0.000000e+00 : f32
    %5 = vector.broadcast %cst_7 : f32 to vector<3x1xf32>
    %cst_8 = arith.constant 0.000000e+00 : f32
    %6 = vector.broadcast %cst_8 : f32 to vector<13x1xf32>
    %cst_9 = arith.constant 0.000000e+00 : f32
    %7 = vector.broadcast %cst_9 : f32 to vector<3x1xf32>
    %c0_10 = arith.constant 0 : index
    %c0_11 = arith.constant 0 : index
    %c128 = arith.constant 128 : index
    %8 = vector.load %arg1[%c0_10, %c0_11, %c128] : memref<1x12x256xf32, #tpu.memory_space<vmem>>, vector<1x12x128xf32>
    %9 = vector.shape_cast %8 : vector<1x12x128xf32> to vector<12x128xf32>
    %c0_12 = arith.constant 0 : index
    %c3 = arith.constant 3 : index
    %c127 = arith.constant 127 : index
    %10 = vector.load %arg1[%c0_12, %c3, %c127] : memref<1x12x256xf32, #tpu.memory_space<vmem>>, vector<1x6x128xf32>
    %11 = vector.shape_cast %10 : vector<1x6x128xf32> to vector<6x128xf32>
    %c0_13 = arith.constant 0 : index
    %c6 = arith.constant 6 : index
    %c120 = arith.constant 120 : index
    %12 = vector.load %arg1[%c0_13, %c6, %c120] : memref<1x12x256xf32, #tpu.memory_space<vmem>>, vector<1x6x128xf32>
    %13 = vector.shape_cast %12 : vector<1x6x128xf32> to vector<6x128xf32>
    %c0_14 = arith.constant 0 : index
    %c6_15 = arith.constant 6 : index
    %c119 = arith.constant 119 : index
    %14 = vector.load %arg1[%c0_14, %c6_15, %c119] : memref<1x12x256xf32, #tpu.memory_space<vmem>>, vector<1x3x128xf32>
    %15 = vector.shape_cast %14 : vector<1x3x128xf32> to vector<3x128xf32>
    %16 = tpu.iota {dimensions = array<i32: 1>} : vector<1x128xi32>
    %c0_i32 = arith.constant 0 : i32
    %17 = vector.broadcast %c0_i32 : i32 to vector<1x128xi32>
    %18 = arith.addi %16, %17 : vector<1x128xi32>
    %19 = arith.sitofp %18 : vector<1x128xi32> to vector<1x128xf32>
    %cst_16 = arith.constant 5.000000e-01 : f32
    %20 = vector.broadcast %cst_16 : f32 to vector<1x128xf32>
    %21 = arith.addf %19, %20 : vector<1x128xf32>
    %cst_17 = arith.constant 1.250000e-01 : f32
    %22 = vector.broadcast %cst_17 : f32 to vector<1x128xf32>
    %23 = arith.mulf %21, %22 : vector<1x128xf32>
    %24 = math.floor %23 : vector<1x128xf32>
    %cst_18 = arith.constant 8.000000e+00 : f32
    %25 = vector.broadcast %cst_18 : f32 to vector<1x128xf32>
    %26 = arith.mulf %24, %25 : vector<1x128xf32>
    %27 = arith.subf %19, %26 : vector<1x128xf32>
    %cst_19 = arith.constant 5.000000e-01 : f32
    %28 = vector.broadcast %cst_19 : f32 to vector<1x128xf32>
    %29 = arith.cmpf olt, %27, %28 : vector<1x128xf32>
    %cst_20 = arith.constant 5.000000e-01 : f32
    %30 = vector.broadcast %cst_20 : f32 to vector<1x128xf32>
    %31 = arith.cmpf olt, %24, %30 : vector<1x128xf32>
    %32 = arith.ori %31, %29 : vector<1x128xi1>
    %c64_i32 = arith.constant 64 : i32
    %33 = vector.broadcast %c64_i32 : i32 to vector<1x128xi32>
    %34 = arith.cmpi slt, %18, %33 : vector<1x128xi32>
    %cst_21 = arith.constant dense<0.000000e+00> : vector<13x128xf32>
    %35 = tpu.matmul %0, %9, %cst_21 {dimension_numbers = #tpu.dot_dimension_numbers<[1], [0], [0], [1], [0, 0, 1, 1], [], []>} : vector<13x12xf32>, vector<12x128xf32>, vector<13x128xf32> -> vector<13x128xf32>
    %cst_22 = arith.constant dense<0.000000e+00> : vector<13x128xf32>
    %36 = tpu.matmul %1, %11, %cst_22 {dimension_numbers = #tpu.dot_dimension_numbers<[1], [0], [0], [1], [0, 0, 1, 1], [], []>} : vector<13x6xf32>, vector<6x128xf32>, vector<13x128xf32> -> vector<13x128xf32>
    %cst_23 = arith.constant 0.000000e+00 : f32
    %37 = vector.shape_cast %29 : vector<1x128xi1> to vector<1x128xi1>
    %38 = vector.broadcast %37 : vector<1x128xi1> to vector<13x128xi1>
    %39 = vector.broadcast %cst_23 : f32 to vector<13x128xf32>
    %40 = arith.select %38, %39, %36 : vector<13x128xi1>, vector<13x128xf32>
    %41 = arith.addf %35, %40 : vector<13x128xf32>
    %cst_24 = arith.constant dense<0.000000e+00> : vector<13x128xf32>
    %42 = tpu.matmul %2, %13, %cst_24 {dimension_numbers = #tpu.dot_dimension_numbers<[1], [0], [0], [1], [0, 0, 1, 1], [], []>} : vector<13x6xf32>, vector<6x128xf32>, vector<13x128xf32> -> vector<13x128xf32>
    %cst_25 = arith.constant 0.000000e+00 : f32
    %43 = vector.shape_cast %31 : vector<1x128xi1> to vector<1x128xi1>
    %44 = vector.broadcast %43 : vector<1x128xi1> to vector<13x128xi1>
    %45 = vector.broadcast %cst_25 : f32 to vector<13x128xf32>
    %46 = arith.select %44, %45, %42 : vector<13x128xi1>, vector<13x128xf32>
    %47 = arith.addf %41, %46 : vector<13x128xf32>
    %cst_26 = arith.constant dense<0.000000e+00> : vector<13x128xf32>
    %48 = tpu.matmul %3, %15, %cst_26 {dimension_numbers = #tpu.dot_dimension_numbers<[1], [0], [0], [1], [0, 0, 1, 1], [], []>} : vector<13x3xf32>, vector<3x128xf32>, vector<13x128xf32> -> vector<13x128xf32>
    %cst_27 = arith.constant 0.000000e+00 : f32
    %49 = vector.shape_cast %32 : vector<1x128xi1> to vector<1x128xi1>
    %50 = vector.broadcast %49 : vector<1x128xi1> to vector<13x128xi1>
    %51 = vector.broadcast %cst_27 : f32 to vector<13x128xf32>
    %52 = arith.select %50, %51, %48 : vector<13x128xi1>, vector<13x128xf32>
    %53 = arith.addf %47, %52 : vector<13x128xf32>
    %54 = vector.extract_strided_slice %9 {offsets = [0, 0], sizes = [3, 128], strides = [1, 1]} : vector<12x128xf32> to vector<3x128xf32>
    %55 = vector.extract_strided_slice %9 {offsets = [3, 0], sizes = [3, 128], strides = [1, 1]} : vector<12x128xf32> to vector<3x128xf32>
    %56 = arith.maximumf %54, %55 : vector<3x128xf32>
    %57 = vector.extract_strided_slice %9 {offsets = [6, 0], sizes = [3, 128], strides = [1, 1]} : vector<12x128xf32> to vector<3x128xf32>
    %58 = vector.extract_strided_slice %9 {offsets = [9, 0], sizes = [3, 128], strides = [1, 1]} : vector<12x128xf32> to vector<3x128xf32>
    %59 = arith.maximumf %57, %58 : vector<3x128xf32>
    %60 = arith.maximumf %56, %59 : vector<3x128xf32>
    %61 = vector.extract_strided_slice %11 {offsets = [0, 0], sizes = [3, 128], strides = [1, 1]} : vector<6x128xf32> to vector<3x128xf32>
    %62 = vector.extract_strided_slice %11 {offsets = [3, 0], sizes = [3, 128], strides = [1, 1]} : vector<6x128xf32> to vector<3x128xf32>
    %63 = arith.maximumf %61, %62 : vector<3x128xf32>
    %64 = vector.extract_strided_slice %13 {offsets = [0, 0], sizes = [3, 128], strides = [1, 1]} : vector<6x128xf32> to vector<3x128xf32>
    %65 = vector.extract_strided_slice %13 {offsets = [3, 0], sizes = [3, 128], strides = [1, 1]} : vector<6x128xf32> to vector<3x128xf32>
    %66 = arith.maximumf %64, %65 : vector<3x128xf32>
    %cst_28 = arith.constant -3.40282347E+38 : f32
    %67 = vector.shape_cast %29 : vector<1x128xi1> to vector<1x128xi1>
    %68 = vector.broadcast %67 : vector<1x128xi1> to vector<3x128xi1>
    %69 = vector.broadcast %cst_28 : f32 to vector<3x128xf32>
    %70 = arith.select %68, %69, %63 : vector<3x128xi1>, vector<3x128xf32>
    %71 = arith.maximumf %60, %70 : vector<3x128xf32>
    %cst_29 = arith.constant -3.40282347E+38 : f32
    %72 = vector.shape_cast %31 : vector<1x128xi1> to vector<1x128xi1>
    %73 = vector.broadcast %72 : vector<1x128xi1> to vector<3x128xi1>
    %74 = vector.broadcast %cst_29 : f32 to vector<3x128xf32>
    %75 = arith.select %73, %74, %66 : vector<3x128xi1>, vector<3x128xf32>
    %76 = arith.maximumf %71, %75 : vector<3x128xf32>
    %cst_30 = arith.constant -3.40282347E+38 : f32
    %77 = vector.shape_cast %32 : vector<1x128xi1> to vector<1x128xi1>
    %78 = vector.broadcast %77 : vector<1x128xi1> to vector<3x128xi1>
    %79 = vector.broadcast %cst_30 : f32 to vector<3x128xf32>
    %80 = arith.select %78, %79, %15 : vector<3x128xi1>, vector<3x128xf32>
    %81 = arith.maximumf %76, %80 : vector<3x128xf32>
    %cst_31 = arith.constant 0.000000e+00 : f32
    %82 = vector.shape_cast %34 : vector<1x128xi1> to vector<1x128xi1>
    %83 = vector.broadcast %82 : vector<1x128xi1> to vector<13x128xi1>
    %84 = vector.broadcast %cst_31 : f32 to vector<13x128xf32>
    %85 = arith.select %83, %53, %84 : vector<13x128xi1>, vector<13x128xf32>
    %cst_32 = arith.constant 0.000000e+00 : f32
    %86 = vector.shape_cast %34 : vector<1x128xi1> to vector<1x128xi1>
    %87 = vector.broadcast %86 : vector<1x128xi1> to vector<3x128xi1>
    %88 = vector.broadcast %cst_32 : f32 to vector<3x128xf32>
    %89 = arith.select %87, %81, %88 : vector<3x128xi1>, vector<3x128xf32>
    %cst_33 = arith.constant dense<0.000000e+00> : vector<13xf32>
    %90 = vector.multi_reduction <add>, %85, %cst_33 [1] : vector<13x128xf32> to vector<13xf32>
    %91 = vector.shape_cast %90 : vector<13xf32> to vector<13x1xf32>
    %92 = arith.addf %4, %91 : vector<13x1xf32>
    %cst_34 = arith.constant dense<0.000000e+00> : vector<3xf32>
    %93 = vector.multi_reduction <add>, %89, %cst_34 [1] : vector<3x128xf32> to vector<3xf32>
    %94 = vector.shape_cast %93 : vector<3xf32> to vector<3x1xf32>
    %95 = arith.addf %5, %94 : vector<3x1xf32>
    %96 = arith.mulf %85, %85 : vector<13x128xf32>
    %cst_35 = arith.constant dense<0.000000e+00> : vector<13xf32>
    %97 = vector.multi_reduction <add>, %96, %cst_35 [1] : vector<13x128xf32> to vector<13xf32>
    %98 = vector.shape_cast %97 : vector<13xf32> to vector<13x1xf32>
    %99 = arith.addf %6, %98 : vector<13x1xf32>
    %100 = arith.mulf %89, %89 : vector<3x128xf32>
    %cst_36 = arith.constant dense<0.000000e+00> : vector<3xf32>
    %101 = vector.multi_reduction <add>, %100, %cst_36 [1] : vector<3x128xf32> to vector<3xf32>
    %102 = vector.shape_cast %101 : vector<3xf32> to vector<3x1xf32>
    %103 = arith.addf %7, %102 : vector<3x1xf32>
    %104 = tpu.concatenate %92, %95 in 0 : vector<13x1xf32>, vector<3x1xf32> -> vector<16x1xf32>
    %c0_37 = arith.constant 0 : index
    %c0_38 = arith.constant 0 : index
    %c0_39 = arith.constant 0 : index
    %105 = vector.load %arg6[%c0_37, %c0_38, %c0_39] : memref<1x16x1xf32, #tpu.memory_space<vmem>>, vector<1x16x1xf32>
    %106 = vector.shape_cast %105 : vector<1x16x1xf32> to vector<16x1xf32>
    %107 = vector.shape_cast %104 : vector<16x1xf32> to vector<1x16x1xf32>
    tpu.vector_store %arg6[%c0_37, %c0_38, %c0_39], %107 {strides = array<i32>} : memref<1x16x1xf32, #tpu.memory_space<vmem>>, vector<1x16x1xf32>,
    %108 = tpu.concatenate %99, %103 in 0 : vector<13x1xf32>, vector<3x1xf32> -> vector<16x1xf32>
    %c0_40 = arith.constant 0 : index
    %c0_41 = arith.constant 0 : index
    %c0_42 = arith.constant 0 : index
    %109 = vector.load %arg7[%c0_40, %c0_41, %c0_42] : memref<1x16x1xf32, #tpu.memory_space<vmem>>, vector<1x16x1xf32>
    %110 = vector.shape_cast %109 : vector<1x16x1xf32> to vector<16x1xf32>
    %111 = vector.shape_cast %108 : vector<16x1xf32> to vector<1x16x1xf32>
    tpu.vector_store %arg7[%c0_40, %c0_41, %c0_42], %111 {strides = array<i32>} : memref<1x16x1xf32, #tpu.memory_space<vmem>>, vector<1x16x1xf32>,
    return
  }
  func.func @transform_0(%arg0: i32) -> (i32, i32, i32) {
    %c0_i32 = arith.constant 0 : i32
    %c0_i32_0 = arith.constant 0 : i32
    %c0_i32_1 = arith.constant 0 : i32
    return %arg0, %c0_i32, %c0_i32_0 : i32, i32, i32
  }
  func.func @transform_1(%arg0: i32) -> (i32, i32) {
    %c0_i32 = arith.constant 0 : i32
    %c0_i32_0 = arith.constant 0 : i32
    %c0_i32_1 = arith.constant 0 : i32
    return %c0_i32, %c0_i32_0 : i32, i32
  }
  func.func @transform_2(%arg0: i32) -> (i32, i32) {
    %c0_i32 = arith.constant 0 : i32
    %c0_i32_0 = arith.constant 0 : i32
    %c0_i32_1 = arith.constant 0 : i32
    return %c0_i32, %c0_i32_0 : i32, i32
  }
  func.func @transform_3(%arg0: i32) -> (i32, i32) {
    %c0_i32 = arith.constant 0 : i32
    %c0_i32_0 = arith.constant 0 : i32
    %c0_i32_1 = arith.constant 0 : i32
    return %c0_i32, %c0_i32_0 : i32, i32
  }
  func.func @transform_4(%arg0: i32) -> (i32, i32) {
    %c0_i32 = arith.constant 0 : i32
    %c0_i32_0 = arith.constant 0 : i32
    %c0_i32_1 = arith.constant 0 : i32
    return %c0_i32, %c0_i32_0 : i32, i32
  }
  func.func @transform_5(%arg0: i32) -> (i32, i32, i32) {
    %c0_i32 = arith.constant 0 : i32
    %c0_i32_0 = arith.constant 0 : i32
    %c0_i32_1 = arith.constant 0 : i32
    return %arg0, %c0_i32, %c0_i32_0 : i32, i32, i32
  }
  func.func @transform_6(%arg0: i32) -> (i32, i32, i32) {
    %c0_i32 = arith.constant 0 : i32
    %c0_i32_0 = arith.constant 0 : i32
    %c0_i32_1 = arith.constant 0 : i32
    return %arg0, %c0_i32, %c0_i32_0 : i32, i32, i32
  }
}

module attributes {stable_mosaic.version = 11 : i64} {
  func.func @_apply_kernel(%arg0: i32, %arg1: memref<1x12x256xf32, #tpu.memory_space<vmem>>, %arg2: memref<13x12xf32, #tpu.memory_space<vmem>>, %arg3: memref<13x6xf32, #tpu.memory_space<vmem>>, %arg4: memref<13x6xf32, #tpu.memory_space<vmem>>, %arg5: memref<13x3xf32, #tpu.memory_space<vmem>>, %arg6: memref<16x1xf32, #tpu.memory_space<vmem>>, %arg7: memref<16x1xf32, #tpu.memory_space<vmem>>, %arg8: memref<1x16x128xf32, #tpu.memory_space<vmem>>) attributes {dimension_semantics = [#tpu.dimension_semantics<parallel>], iteration_bounds = array<i64: 2>, scalar_prefetch = 0 : i64, scratch_operands = 0 : i64, tpu.core_type = #tpu.core_type<tc>, window_params = [{transform_indices = @transform_0, window_bounds = array<i64: 1, 12, 256>}, {pipeline_mode = #tpu.pipeline_mode<synchronous>, transform_indices = @transform_1, window_bounds = array<i64: 13, 12>}, {pipeline_mode = #tpu.pipeline_mode<synchronous>, transform_indices = @transform_2, window_bounds = array<i64: 13, 6>}, {pipeline_mode = #tpu.pipeline_mode<synchronous>, transform_indices = @transform_3, window_bounds = array<i64: 13, 6>}, {pipeline_mode = #tpu.pipeline_mode<synchronous>, transform_indices = @transform_4, window_bounds = array<i64: 13, 3>}, {pipeline_mode = #tpu.pipeline_mode<synchronous>, transform_indices = @transform_5, window_bounds = array<i64: 16, 1>}, {pipeline_mode = #tpu.pipeline_mode<synchronous>, transform_indices = @transform_6, window_bounds = array<i64: 16, 1>}, {transform_indices = @transform_7, window_bounds = array<i64: 1, 16, 128>}]} {
    %c0 = arith.constant 0 : index
    %c0_0 = arith.constant 0 : index
    %0 = vector.load %arg2[%c0, %c0_0] : memref<13x12xf32, #tpu.memory_space<vmem>>, vector<13x12xf32>
    %c0_1 = arith.constant 0 : index
    %c0_2 = arith.constant 0 : index
    %1 = vector.load %arg3[%c0_1, %c0_2] : memref<13x6xf32, #tpu.memory_space<vmem>>, vector<13x6xf32>
    %c0_3 = arith.constant 0 : index
    %c0_4 = arith.constant 0 : index
    %2 = vector.load %arg4[%c0_3, %c0_4] : memref<13x6xf32, #tpu.memory_space<vmem>>, vector<13x6xf32>
    %c0_5 = arith.constant 0 : index
    %c0_6 = arith.constant 0 : index
    %3 = vector.load %arg5[%c0_5, %c0_6] : memref<13x3xf32, #tpu.memory_space<vmem>>, vector<13x3xf32>
    %c0_7 = arith.constant 0 : index
    %c0_8 = arith.constant 0 : index
    %4 = vector.load %arg6[%c0_7, %c0_8] : memref<16x1xf32, #tpu.memory_space<vmem>>, vector<13x1xf32>
    %c0_9 = arith.constant 0 : index
    %c0_10 = arith.constant 0 : index
    %5 = vector.load %arg7[%c0_9, %c0_10] : memref<16x1xf32, #tpu.memory_space<vmem>>, vector<13x1xf32>
    %c13 = arith.constant 13 : index
    %c0_11 = arith.constant 0 : index
    %6 = vector.load %arg6[%c13, %c0_11] : memref<16x1xf32, #tpu.memory_space<vmem>>, vector<3x1xf32>
    %c13_12 = arith.constant 13 : index
    %c0_13 = arith.constant 0 : index
    %7 = vector.load %arg7[%c13_12, %c0_13] : memref<16x1xf32, #tpu.memory_space<vmem>>, vector<3x1xf32>
    %c0_14 = arith.constant 0 : index
    %c0_15 = arith.constant 0 : index
    %c128 = arith.constant 128 : index
    %8 = vector.load %arg1[%c0_14, %c0_15, %c128] : memref<1x12x256xf32, #tpu.memory_space<vmem>>, vector<1x12x128xf32>
    %9 = vector.shape_cast %8 : vector<1x12x128xf32> to vector<12x128xf32>
    %c0_16 = arith.constant 0 : index
    %c3 = arith.constant 3 : index
    %c127 = arith.constant 127 : index
    %10 = vector.load %arg1[%c0_16, %c3, %c127] : memref<1x12x256xf32, #tpu.memory_space<vmem>>, vector<1x6x128xf32>
    %11 = vector.shape_cast %10 : vector<1x6x128xf32> to vector<6x128xf32>
    %c0_17 = arith.constant 0 : index
    %c6 = arith.constant 6 : index
    %c120 = arith.constant 120 : index
    %12 = vector.load %arg1[%c0_17, %c6, %c120] : memref<1x12x256xf32, #tpu.memory_space<vmem>>, vector<1x6x128xf32>
    %13 = vector.shape_cast %12 : vector<1x6x128xf32> to vector<6x128xf32>
    %c0_18 = arith.constant 0 : index
    %c6_19 = arith.constant 6 : index
    %c119 = arith.constant 119 : index
    %14 = vector.load %arg1[%c0_18, %c6_19, %c119] : memref<1x12x256xf32, #tpu.memory_space<vmem>>, vector<1x3x128xf32>
    %15 = vector.shape_cast %14 : vector<1x3x128xf32> to vector<3x128xf32>
    %16 = tpu.iota {dimensions = array<i32: 1>} : vector<1x128xi32>
    %c0_i32 = arith.constant 0 : i32
    %17 = vector.broadcast %c0_i32 : i32 to vector<1x128xi32>
    %18 = arith.addi %16, %17 : vector<1x128xi32>
    %19 = arith.sitofp %18 : vector<1x128xi32> to vector<1x128xf32>
    %cst = arith.constant 5.000000e-01 : f32
    %20 = vector.broadcast %cst : f32 to vector<1x128xf32>
    %21 = arith.addf %19, %20 : vector<1x128xf32>
    %cst_20 = arith.constant 1.250000e-01 : f32
    %22 = vector.broadcast %cst_20 : f32 to vector<1x128xf32>
    %23 = arith.mulf %21, %22 : vector<1x128xf32>
    %24 = math.floor %23 : vector<1x128xf32>
    %cst_21 = arith.constant 8.000000e+00 : f32
    %25 = vector.broadcast %cst_21 : f32 to vector<1x128xf32>
    %26 = arith.mulf %24, %25 : vector<1x128xf32>
    %27 = arith.subf %19, %26 : vector<1x128xf32>
    %cst_22 = arith.constant 5.000000e-01 : f32
    %28 = vector.broadcast %cst_22 : f32 to vector<1x128xf32>
    %29 = arith.cmpf olt, %27, %28 : vector<1x128xf32>
    %cst_23 = arith.constant 5.000000e-01 : f32
    %30 = vector.broadcast %cst_23 : f32 to vector<1x128xf32>
    %31 = arith.cmpf olt, %24, %30 : vector<1x128xf32>
    %32 = arith.ori %31, %29 : vector<1x128xi1>
    %cst_24 = arith.constant dense<0.000000e+00> : vector<13x128xf32>
    %33 = tpu.matmul %0, %9, %cst_24 {dimension_numbers = #tpu.dot_dimension_numbers<[1], [0], [0], [1], [0, 0, 1, 1], [], []>} : vector<13x12xf32>, vector<12x128xf32>, vector<13x128xf32> -> vector<13x128xf32>
    %cst_25 = arith.constant dense<0.000000e+00> : vector<13x128xf32>
    %34 = tpu.matmul %1, %11, %cst_25 {dimension_numbers = #tpu.dot_dimension_numbers<[1], [0], [0], [1], [0, 0, 1, 1], [], []>} : vector<13x6xf32>, vector<6x128xf32>, vector<13x128xf32> -> vector<13x128xf32>
    %cst_26 = arith.constant 0.000000e+00 : f32
    %35 = vector.shape_cast %29 : vector<1x128xi1> to vector<1x128xi1>
    %36 = vector.broadcast %35 : vector<1x128xi1> to vector<13x128xi1>
    %37 = vector.broadcast %cst_26 : f32 to vector<13x128xf32>
    %38 = arith.select %36, %37, %34 : vector<13x128xi1>, vector<13x128xf32>
    %39 = arith.addf %33, %38 : vector<13x128xf32>
    %cst_27 = arith.constant dense<0.000000e+00> : vector<13x128xf32>
    %40 = tpu.matmul %2, %13, %cst_27 {dimension_numbers = #tpu.dot_dimension_numbers<[1], [0], [0], [1], [0, 0, 1, 1], [], []>} : vector<13x6xf32>, vector<6x128xf32>, vector<13x128xf32> -> vector<13x128xf32>
    %cst_28 = arith.constant 0.000000e+00 : f32
    %41 = vector.shape_cast %31 : vector<1x128xi1> to vector<1x128xi1>
    %42 = vector.broadcast %41 : vector<1x128xi1> to vector<13x128xi1>
    %43 = vector.broadcast %cst_28 : f32 to vector<13x128xf32>
    %44 = arith.select %42, %43, %40 : vector<13x128xi1>, vector<13x128xf32>
    %45 = arith.addf %39, %44 : vector<13x128xf32>
    %cst_29 = arith.constant dense<0.000000e+00> : vector<13x128xf32>
    %46 = tpu.matmul %3, %15, %cst_29 {dimension_numbers = #tpu.dot_dimension_numbers<[1], [0], [0], [1], [0, 0, 1, 1], [], []>} : vector<13x3xf32>, vector<3x128xf32>, vector<13x128xf32> -> vector<13x128xf32>
    %cst_30 = arith.constant 0.000000e+00 : f32
    %47 = vector.shape_cast %32 : vector<1x128xi1> to vector<1x128xi1>
    %48 = vector.broadcast %47 : vector<1x128xi1> to vector<13x128xi1>
    %49 = vector.broadcast %cst_30 : f32 to vector<13x128xf32>
    %50 = arith.select %48, %49, %46 : vector<13x128xi1>, vector<13x128xf32>
    %51 = arith.addf %45, %50 : vector<13x128xf32>
    %52 = vector.extract_strided_slice %9 {offsets = [0, 0], sizes = [3, 128], strides = [1, 1]} : vector<12x128xf32> to vector<3x128xf32>
    %53 = vector.extract_strided_slice %9 {offsets = [3, 0], sizes = [3, 128], strides = [1, 1]} : vector<12x128xf32> to vector<3x128xf32>
    %54 = arith.maximumf %52, %53 : vector<3x128xf32>
    %55 = vector.extract_strided_slice %9 {offsets = [6, 0], sizes = [3, 128], strides = [1, 1]} : vector<12x128xf32> to vector<3x128xf32>
    %56 = vector.extract_strided_slice %9 {offsets = [9, 0], sizes = [3, 128], strides = [1, 1]} : vector<12x128xf32> to vector<3x128xf32>
    %57 = arith.maximumf %55, %56 : vector<3x128xf32>
    %58 = arith.maximumf %54, %57 : vector<3x128xf32>
    %59 = vector.extract_strided_slice %11 {offsets = [0, 0], sizes = [3, 128], strides = [1, 1]} : vector<6x128xf32> to vector<3x128xf32>
    %60 = vector.extract_strided_slice %11 {offsets = [3, 0], sizes = [3, 128], strides = [1, 1]} : vector<6x128xf32> to vector<3x128xf32>
    %61 = arith.maximumf %59, %60 : vector<3x128xf32>
    %62 = vector.extract_strided_slice %13 {offsets = [0, 0], sizes = [3, 128], strides = [1, 1]} : vector<6x128xf32> to vector<3x128xf32>
    %63 = vector.extract_strided_slice %13 {offsets = [3, 0], sizes = [3, 128], strides = [1, 1]} : vector<6x128xf32> to vector<3x128xf32>
    %64 = arith.maximumf %62, %63 : vector<3x128xf32>
    %cst_31 = arith.constant -3.40282347E+38 : f32
    %65 = vector.shape_cast %29 : vector<1x128xi1> to vector<1x128xi1>
    %66 = vector.broadcast %65 : vector<1x128xi1> to vector<3x128xi1>
    %67 = vector.broadcast %cst_31 : f32 to vector<3x128xf32>
    %68 = arith.select %66, %67, %61 : vector<3x128xi1>, vector<3x128xf32>
    %69 = arith.maximumf %58, %68 : vector<3x128xf32>
    %cst_32 = arith.constant -3.40282347E+38 : f32
    %70 = vector.shape_cast %31 : vector<1x128xi1> to vector<1x128xi1>
    %71 = vector.broadcast %70 : vector<1x128xi1> to vector<3x128xi1>
    %72 = vector.broadcast %cst_32 : f32 to vector<3x128xf32>
    %73 = arith.select %71, %72, %64 : vector<3x128xi1>, vector<3x128xf32>
    %74 = arith.maximumf %69, %73 : vector<3x128xf32>
    %cst_33 = arith.constant -3.40282347E+38 : f32
    %75 = vector.shape_cast %32 : vector<1x128xi1> to vector<1x128xi1>
    %76 = vector.broadcast %75 : vector<1x128xi1> to vector<3x128xi1>
    %77 = vector.broadcast %cst_33 : f32 to vector<3x128xf32>
    %78 = arith.select %76, %77, %15 : vector<3x128xi1>, vector<3x128xf32>
    %79 = arith.maximumf %74, %78 : vector<3x128xf32>
    %80 = vector.broadcast %4 : vector<13x1xf32> to vector<13x128xf32>
    %81 = arith.mulf %51, %80 : vector<13x128xf32>
    %82 = vector.broadcast %5 : vector<13x1xf32> to vector<13x128xf32>
    %83 = arith.addf %81, %82 : vector<13x128xf32>
    %cst_34 = arith.constant 0.000000e+00 : f32
    %84 = vector.broadcast %cst_34 : f32 to vector<13x128xf32>
    %85 = arith.maximumf %83, %84 : vector<13x128xf32>
    %c0_35 = arith.constant 0 : index
    %c0_36 = arith.constant 0 : index
    %c0_37 = arith.constant 0 : index
    %86 = vector.load %arg8[%c0_35, %c0_36, %c0_37] : memref<1x16x128xf32, #tpu.memory_space<vmem>>, vector<1x13x128xf32>
    %87 = vector.shape_cast %86 : vector<1x13x128xf32> to vector<13x128xf32>
    %88 = vector.shape_cast %85 : vector<13x128xf32> to vector<1x13x128xf32>
    tpu.vector_store %arg8[%c0_35, %c0_36, %c0_37], %88 {strides = array<i32>} : memref<1x16x128xf32, #tpu.memory_space<vmem>>, vector<1x13x128xf32>,
    %89 = vector.broadcast %6 : vector<3x1xf32> to vector<3x128xf32>
    %90 = arith.mulf %79, %89 : vector<3x128xf32>
    %91 = vector.broadcast %7 : vector<3x1xf32> to vector<3x128xf32>
    %92 = arith.addf %90, %91 : vector<3x128xf32>
    %cst_38 = arith.constant 0.000000e+00 : f32
    %93 = vector.broadcast %cst_38 : f32 to vector<3x128xf32>
    %94 = arith.maximumf %92, %93 : vector<3x128xf32>
    %c0_39 = arith.constant 0 : index
    %c13_40 = arith.constant 13 : index
    %c0_41 = arith.constant 0 : index
    %95 = vector.load %arg8[%c0_39, %c13_40, %c0_41] : memref<1x16x128xf32, #tpu.memory_space<vmem>>, vector<1x3x128xf32>
    %96 = vector.shape_cast %95 : vector<1x3x128xf32> to vector<3x128xf32>
    %97 = vector.shape_cast %94 : vector<3x128xf32> to vector<1x3x128xf32>
    tpu.vector_store %arg8[%c0_39, %c13_40, %c0_41], %97 {strides = array<i32>} : memref<1x16x128xf32, #tpu.memory_space<vmem>>, vector<1x3x128xf32>,
    return
  }
  func.func @transform_0(%arg0: i32) -> (i32, i32, i32) {
    %c0_i32 = arith.constant 0 : i32
    %c0_i32_0 = arith.constant 0 : i32
    %c0_i32_1 = arith.constant 0 : i32
    return %arg0, %c0_i32, %c0_i32_0 : i32, i32, i32
  }
  func.func @transform_1(%arg0: i32) -> (i32, i32) {
    %c0_i32 = arith.constant 0 : i32
    %c0_i32_0 = arith.constant 0 : i32
    %c0_i32_1 = arith.constant 0 : i32
    return %c0_i32, %c0_i32_0 : i32, i32
  }
  func.func @transform_2(%arg0: i32) -> (i32, i32) {
    %c0_i32 = arith.constant 0 : i32
    %c0_i32_0 = arith.constant 0 : i32
    %c0_i32_1 = arith.constant 0 : i32
    return %c0_i32, %c0_i32_0 : i32, i32
  }
  func.func @transform_3(%arg0: i32) -> (i32, i32) {
    %c0_i32 = arith.constant 0 : i32
    %c0_i32_0 = arith.constant 0 : i32
    %c0_i32_1 = arith.constant 0 : i32
    return %c0_i32, %c0_i32_0 : i32, i32
  }
  func.func @transform_4(%arg0: i32) -> (i32, i32) {
    %c0_i32 = arith.constant 0 : i32
    %c0_i32_0 = arith.constant 0 : i32
    %c0_i32_1 = arith.constant 0 : i32
    return %c0_i32, %c0_i32_0 : i32, i32
  }
  func.func @transform_5(%arg0: i32) -> (i32, i32) {
    %c0_i32 = arith.constant 0 : i32
    %c0_i32_0 = arith.constant 0 : i32
    %c0_i32_1 = arith.constant 0 : i32
    return %c0_i32, %c0_i32_0 : i32, i32
  }
  func.func @transform_6(%arg0: i32) -> (i32, i32) {
    %c0_i32 = arith.constant 0 : i32
    %c0_i32_0 = arith.constant 0 : i32
    %c0_i32_1 = arith.constant 0 : i32
    return %c0_i32, %c0_i32_0 : i32, i32
  }
  func.func @transform_7(%arg0: i32) -> (i32, i32, i32) {
    %c0_i32 = arith.constant 0 : i32
    %c0_i32_0 = arith.constant 0 : i32
    %c0_i32_1 = arith.constant 0 : i32
    return %arg0, %c0_i32, %c0_i32_0 : i32, i32, i32
  }
}

</mosaic_0001>

<llo_original>
// kernel: initial_block.3
$region0: #{initial_block.3}
  #allocation0 [shape = 'u32[]', space=smem, size = 0x4, offset = 0x4, fixed_abs, tag = 'smem constant byte address 0x4 - core index']
  #allocation1 [shape = 'u32[72,128]{1,0:T(1,128)}', space=vmem, size = 0x9000, scoped, tag = 'internal scratch']
  %s0 = inlined_call_operand.vmem [shape: f32[2,12,256], index: 0, kind: input, shape index: {}]
  %s1 = inlined_call_operand.vmem [shape: f32[13,12], index: 1, kind: input, shape index: {}]
  %s2 = inlined_call_operand.vmem [shape: f32[13,6], index: 2, kind: input, shape index: {}]
  %s3 = inlined_call_operand.vmem [shape: f32[13,6], index: 3, kind: input, shape index: {}]
  %s4 = inlined_call_operand.vmem [shape: f32[13,3], index: 4, kind: input, shape index: {}]
  %s5 = inlined_call_operand.vmem [shape: f32[16,1], index: 5, kind: input, shape index: {}]
  %s6 = inlined_call_operand.vmem [shape: f32[16,1], index: 6, kind: input, shape index: {}]
  %s7 = inlined_call_operand.vmem [shape: f32[2,16,128], index: 7, kind: output, shape index: {}]
  %s8 = sld [smem:[#allocation0]]
  $region61: #{initial_block.3} parent=0
    _
  %s10 = ssub.s32 1, %s8
  %s11 = scalar_select 0, %s10, %s8
  loop: start=0, step=1, limit=4
  $region2: #{initial_block.3} parent=0 // loop_pre_header
    _
  $region3: #{initial_block.3} parent=0 // loop_header
    %s13 = sphi 0, %s17
    %p14 = scmp.ge.s32.totalorder %s13, 4
    %s23 = sphi 0, %s25
    %s26 = sphi 0, %s23
    %s27 = sphi 0, %s26
    %s43 = sphi 0, %s27
    %s47 = sphi 0, %s47
    %s49 = sphi 0, %s47
    %s50 = sphi 0, %s49
    %s64 = sphi 0, %s50
    %s68 = sphi 0, %s68
    %s70 = sphi 0, %s68
    %s71 = sphi 0, %s70
    %s85 = sphi 0, %s71
    %s89 = sphi 0, %s89
    %s91 = sphi 0, %s89
    %s92 = sphi 0, %s91
    %s106 = sphi 0, %s92
    %s110 = sphi 0, %s110
    %s112 = sphi 0, %s110
    %s113 = sphi 0, %s112
    %s127 = sphi 0, %s113
    %s131 = sphi 0, %s131
    %s133 = sphi 0, %s131
    %s134 = sphi 0, %s133
    %s148 = sphi 0, %s134
    %s152 = sphi 0, %s152
    %s154 = sphi 0, %s152
    %s155 = sphi 0, %s154
    %s169 = sphi 0, %s155
    %s175 = sphi 0, %s177
    %s178 = sphi 0, %s175
    %s179 = sphi 0, %s178
    %s195 = sphi 0, %s179
  $region4: #{initial_block.3} parent=0 // loop_header_branch
    %16 = sbr.rel (%p14) target = $region8
  $region5: #{initial_block.3} parent=0 // loop_body
    %s18 = ssub.s32 %s13, 1
    %s19 = ssub.s32 %s13, 2
    %s20 = sadd.s32 %s13, 1
    %s21 = ssub.s32 %s13, %s20
    %p22 = scmp.eq.s32.totalorder %s21, 0
    %s24 = sadd.s32 %s23, 1
    %s25 = scalar_select %p22, %s23, %s24
    %p28 = pneg %p22
    %p29 = scmp.eq.s32.totalorder %s13, 1
    %p30 = por %p28, %p29
    %p31 = scmp.ne.s32.totalorder %s23, %s26
    %p32 = scmp.eq.s32.totalorder %s13, 0
    %p33 = por %p31, %p32
    %p34 = scmp.ne.s32.totalorder %s23, %s26
    %p35 = scmp.eq.s32.totalorder %s18, 1
    %p36 = por %p34, %p35
    %p37 = scmp.ne.s32.totalorder %s26, %s27
    %p38 = scmp.eq.s32.totalorder %s18, 0
    %p39 = por %p37, %p38
    %p40 = scmp.ne.s32.totalorder %s26, %s27
    %p41 = scmp.eq.s32.totalorder %s19, 1
    %p42 = por %p40, %p41
    %p44 = scmp.ne.s32.totalorder %s27, %s43
    %p45 = scmp.eq.s32.totalorder %s19, 0
    %p46 = por %p44, %p45
    %s48 = sadd.s32 %s47, 1
    %p51 = scmp.eq.s32.totalorder %s13, 1
    %p52 = scmp.ne.s32.totalorder %s47, %s49
    %p53 = scmp.eq.s32.totalorder %s13, 0
    %p54 = por %p52, %p53
    %p55 = scmp.ne.s32.totalorder %s47, %s49
    %p56 = scmp.eq.s32.totalorder %s18, 1
    %p57 = por %p55, %p56
    %p58 = scmp.ne.s32.totalorder %s49, %s50
    %p59 = scmp.eq.s32.totalorder %s18, 0
    %p60 = por %p58, %p59
    %p61 = scmp.ne.s32.totalorder %s49, %s50
    %p62 = scmp.eq.s32.totalorder %s19, 1
    %p63 = por %p61, %p62
    %p65 = scmp.ne.s32.totalorder %s50, %s64
    %p66 = scmp.eq.s32.totalorder %s19, 0
    %p67 = por %p65, %p66
    %s69 = sadd.s32 %s68, 1
    %p72 = scmp.eq.s32.totalorder %s13, 1
    %p73 = scmp.ne.s32.totalorder %s68, %s70
    %p74 = scmp.eq.s32.totalorder %s13, 0
    %p75 = por %p73, %p74
    %p76 = scmp.ne.s32.totalorder %s68, %s70
    %p77 = scmp.eq.s32.totalorder %s18, 1
    %p78 = por %p76, %p77
    %p79 = scmp.ne.s32.totalorder %s70, %s71
    %p80 = scmp.eq.s32.totalorder %s18, 0
    %p81 = por %p79, %p80
    %p82 = scmp.ne.s32.totalorder %s70, %s71
    %p83 = scmp.eq.s32.totalorder %s19, 1
    %p84 = por %p82, %p83
    %p86 = scmp.ne.s32.totalorder %s71, %s85
    %p87 = scmp.eq.s32.totalorder %s19, 0
    %p88 = por %p86, %p87
    %s90 = sadd.s32 %s89, 1
    %p93 = scmp.eq.s32.totalorder %s13, 1
    %p94 = scmp.ne.s32.totalorder %s89, %s91
    %p95 = scmp.eq.s32.totalorder %s13, 0
    %p96 = por %p94, %p95
    %p97 = scmp.ne.s32.totalorder %s89, %s91
    %p98 = scmp.eq.s32.totalorder %s18, 1
    %p99 = por %p97, %p98
    %p100 = scmp.ne.s32.totalorder %s91, %s92
    %p101 = scmp.eq.s32.totalorder %s18, 0
    %p102 = por %p100, %p101
    %p103 = scmp.ne.s32.totalorder %s91, %s92
    %p104 = scmp.eq.s32.totalorder %s19, 1
    %p105 = por %p103, %p104
    %p107 = scmp.ne.s32.totalorder %s92, %s106
    %p108 = scmp.eq.s32.totalorder %s19, 0
    %p109 = por %p107, %p108
    %s111 = sadd.s32 %s110, 1
    %p114 = scmp.eq.s32.totalorder %s13, 1
    %p115 = scmp.ne.s32.totalorder %s110, %s112
    %p116 = scmp.eq.s32.totalorder %s13, 0
    %p117 = por %p115, %p116
    %p118 = scmp.ne.s32.totalorder %s110, %s112
    %p119 = scmp.eq.s32.totalorder %s18, 1
    %p120 = por %p118, %p119
    %p121 = scmp.ne.s32.totalorder %s112, %s113
    %p122 = scmp.eq.s32.totalorder %s18, 0
    %p123 = por %p121, %p122
    %p124 = scmp.ne.s32.totalorder %s112, %s113
    %p125 = scmp.eq.s32.totalorder %s19, 1
    %p126 = por %p124, %p125
    %p128 = scmp.ne.s32.totalorder %s113, %s127
    %p129 = scmp.eq.s32.totalorder %s19, 0
    %p130 = por %p128, %p129
    %s132 = sadd.s32 %s131, 1
    %p135 = scmp.eq.s32.totalorder %s13, 1
    %p136 = scmp.ne.s32.totalorder %s131, %s133
    %p137 = scmp.eq.s32.totalorder %s13, 0
    %p138 = por %p136, %p137
    %p139 = scmp.ne.s32.totalorder %s131, %s133
    %p140 = scmp.eq.s32.totalorder %s18, 1
    %p141 = por %p139, %p140
    %p142 = scmp.ne.s32.totalorder %s133, %s134
    %p143 = scmp.eq.s32.totalorder %s18, 0
    %p144 = por %p142, %p143
    %p145 = scmp.ne.s32.totalorder %s133, %s134
    %p146 = scmp.eq.s32.totalorder %s19, 1
    %p147 = por %p145, %p146
    %p149 = scmp.ne.s32.totalorder %s134, %s148
    %p150 = scmp.eq.s32.totalorder %s19, 0
    %p151 = por %p149, %p150
    %s153 = sadd.s32 %s152, 1
    %p156 = scmp.eq.s32.totalorder %s13, 1
    %p157 = scmp.ne.s32.totalorder %s152, %s154
    %p158 = scmp.eq.s32.totalorder %s13, 0
    %p159 = por %p157, %p158
    %p160 = scmp.ne.s32.totalorder %s152, %s154
    %p161 = scmp.eq.s32.totalorder %s18, 1
    %p162 = por %p160, %p161
    %p163 = scmp.ne.s32.totalorder %s154, %s155
    %p164 = scmp.eq.s32.totalorder %s18, 0
    %p165 = por %p163, %p164
    %p166 = scmp.ne.s32.totalorder %s154, %s155
    %p167 = scmp.eq.s32.totalorder %s19, 1
    %p168 = por %p166, %p167
    %p170 = scmp.ne.s32.totalorder %s155, %s169
    %p171 = scmp.eq.s32.totalorder %s19, 0
    %p172 = por %p170, %p171
    %s173 = ssub.s32 %s13, %s20
    %p174 = scmp.eq.s32.totalorder %s173, 0
    %s176 = sadd.s32 %s175, 1
    %s177 = scalar_select %p174, %s175, %s176
    %p180 = pneg %p174
    %p181 = scmp.eq.s32.totalorder %s13, 1
    %p182 = por %p180, %p181
    %p183 = scmp.ne.s32.totalorder %s175, %s178
    %p184 = scmp.eq.s32.totalorder %s13, 0
    %p185 = por %p183, %p184
    %p186 = scmp.ne.s32.totalorder %s175, %s178
    %p187 = scmp.eq.s32.totalorder %s18, 1
    %p188 = por %p186, %p187
    %p189 = scmp.ne.s32.totalorder %s178, %s179
    %p190 = scmp.eq.s32.totalorder %s18, 0
    %p191 = por %p189, %p190
    %p192 = scmp.ne.s32.totalorder %s178, %s179
    %p193 = scmp.eq.s32.totalorder %s19, 1
    %p194 = por %p192, %p193
    %p196 = scmp.ne.s32.totalorder %s179, %s195
    %p197 = scmp.eq.s32.totalorder %s19, 0
    %p198 = por %p196, %p197
    %p199 = scmp.le.s32.totalorder 1, %s13
    %p200 = scmp.lt.s32.totalorder %s13, 3
    %p201 = pnand %p199, %p200
    %p202 = pneg %p201
    // Predicated region
    $region9: #{initial_block.3} parent=5 // pred_check
      _
    $region10: #{initial_block.3} parent=5 // pred_check_branch
      %204 = sbr.rel (%p201) target = $region12
    $region11: #{initial_block.3} parent=5 // pred_region
      %s205 = ssub.s32 %s13, 1
      // Predicated region
      $region13: #{initial_block.3} parent=11 // pred_check
        %p206 = pneg %p60
      $region14: #{initial_block.3} parent=11 // pred_check_branch
        %208 = sbr.rel (%p206) target = $region16
      $region15: #{initial_block.3} parent=11 // pred_region
        _
      $region16: #{initial_block.3} parent=11 // pred_fallthru
        _
      // Predicated region
      $region17: #{initial_block.3} parent=11 // pred_check
        %p209 = pneg %p81
      $region18: #{initial_block.3} parent=11 // pred_check_branch
        %211 = sbr.rel (%p209) target = $region20
      $region19: #{initial_block.3} parent=11 // pred_region
        _
      $region20: #{initial_block.3} parent=11 // pred_fallthru
        _
      // Predicated region
      $region21: #{initial_block.3} parent=11 // pred_check
        %p212 = pneg %p102
      $region22: #{initial_block.3} parent=11 // pred_check_branch
        %214 = sbr.rel (%p212) target = $region24
      $region23: #{initial_block.3} parent=11 // pred_region
        _
      $region24: #{initial_block.3} parent=11 // pred_fallthru
        _
      // Predicated region
      $region25: #{initial_block.3} parent=11 // pred_check
        %p215 = pneg %p123
      $region26: #{initial_block.3} parent=11 // pred_check_branch
        %217 = sbr.rel (%p215) target = $region28
      $region27: #{initial_block.3} parent=11 // pred_region
        _
      $region28: #{initial_block.3} parent=11 // pred_fallthru
        _
      // Predicated region
      $region29: #{initial_block.3} parent=11 // pred_check
        %p218 = pneg %p144
      $region30: #{initial_block.3} parent=11 // pred_check_branch
        %220 = sbr.rel (%p218) target = $region32
      $region31: #{initial_block.3} parent=11 // pred_region
        _
      $region32: #{initial_block.3} parent=11 // pred_fallthru
        _
      // Predicated region
      $region33: #{initial_block.3} parent=11 // pred_check
        %p221 = pneg %p165
      $region34: #{initial_block.3} parent=11 // pred_check_branch
        %223 = sbr.rel (%p221) target = $region36
      $region35: #{initial_block.3} parent=11 // pred_region
        _
      $region36: #{initial_block.3} parent=11 // pred_fallthru
        _
    $region12: #{initial_block.3} parent=5 // pred_fallthru
      _
    %p224 = scmp.lt.s32.totalorder %s13, 2
    // Predicated region
    $region37: #{initial_block.3} parent=5 // pred_check
      %p225 = pneg %p224
    $region38: #{initial_block.3} parent=5 // pred_check_branch
      %227 = sbr.rel (%p225) target = $region40
    $region39: #{initial_block.3} parent=5 // pred_region
      // Predicated region
      $region41: #{initial_block.3} parent=39 // pred_check
        %p228 = pneg %p33
      $region42: #{initial_block.3} parent=39 // pred_check_branch
        %230 = sbr.rel (%p228) target = $region44
      $region43: #{initial_block.3} parent=39 // pred_region
        %p231 = scmp.lt.s32.totalorder %s13, 1
        %s232 = scalar_select %p231, %s13, 1
        %s233 = smul.addr %s232, 4
        %s234 = smul.addr %s233, 8
        %s235 = scalar_lea.vmem %s0, %s234
      $region44: #{initial_block.3} parent=39 // pred_fallthru
        _
    $region40: #{initial_block.3} parent=5 // pred_fallthru
      _
    %p236 = scmp.le.s32.totalorder 1, %s13
    %p237 = scmp.lt.s32.totalorder %s13, 3
    %p238 = pnand %p236, %p237
    %p239 = pneg %p238
    // Predicated region
    $region45: #{initial_block.3} parent=5 // pred_check
      _
    $region46: #{initial_block.3} parent=5 // pred_check_branch
      %241 = sbr.rel (%p238) target = $region48
    $region47: #{initial_block.3} parent=5 // pred_region
      %s242 = ssub.s32 %s13, 1
      %p243 = scmp.lt.s32.totalorder %s18, 1
      %s244 = scalar_select %p243, %s18, 1
      %s245 = smul.addr %s244, 4
      %s246 = smul.addr %s245, 8
      %s247 = scalar_lea.vmem %s0, %s246
      %p248 = pneg %p39
      %p249 = pneg %p36
      %p250 = pneg %p60
      %p251 = pneg %p57
      %p252 = pneg %p81
      %p253 = pneg %p78
      %p254 = pneg %p102
      %p255 = pneg %p99
      %p256 = pneg %p123
      %p257 = pneg %p120
      %p258 = pneg %p144
      %p259 = pneg %p141
      %p260 = pneg %p165
      %p261 = pneg %p162
      %p262 = pneg %p191
      %p263 = pneg %p188
      %p264 = scmp.lt.s32.totalorder %s18, 1
      %s265 = scalar_select %p264, %s18, 1
      %s266 = smul.addr %s265, 2
      %s267 = smul.addr %s266, 8
      %s268 = scalar_lea.vmem %s7, %s267
      %p269 = scmp.lt.s32.totalorder %s18, 1
      %s270 = scalar_select %p269, %s18, 1
      %s271 = smul.addr %s270, 4
      %s272 = smul.addr %s271, 8
      %s273 = scalar_lea.vmem %s0, %s272
      %p274 = scmp.lt.s32.totalorder %s18, 1
      %s275 = scalar_select %p274, %s18, 1
      %s276 = smul.addr %s275, 2
      %s277 = smul.addr %s276, 8
      %s278 = scalar_lea.vmem %s7, %s277
      %v279 = vld [vmem:[%s1] sm:$0xff]
      %v280 = vld [vmem:[%s1 + $0x8] sm:$0x1f]
      %v281 = vld [vmem:[%s2] sm:$0xff]
      %v282 = vld [vmem:[%s2 + $0x8] sm:$0x1f]
      %v283 = vld [vmem:[%s3] sm:$0xff]
      %v284 = vld [vmem:[%s3 + $0x8] sm:$0x1f]
      %v285 = vld [vmem:[%s4] sm:$0xff]
      %v286 = vld [vmem:[%s4 + $0x8] sm:$0x1f]
      %v287 = vld [vmem:[%s5] sm:$0xff]
      %v288 = vld [vmem:[%s5 + $0x8] sm:$0x1f]
      %v289 = vld [vmem:[%s6] sm:$0xff]
      %v290 = vld [vmem:[%s6 + $0x8] sm:$0x1f]
      %v291 = vld [vmem:[%s5 + $0xd] sm:$0x7]
      %v292 = vld [vmem:[%s6 + $0xd] sm:$0x7]
      %v293 = vld [vmem:[%s273 + $0x8] sm:$0xff]
      %v294 = vld [vmem:[%s273 + $0x18] sm:$0xf]
      %v295 = vld [vmem:[%s273] sm:$0xf8]
      %v296 = vld [vmem:[%s273 + $0x8] sm:$0xf8]
      %v297 = vld [vmem:[%s273 + $0x10] sm:$0x1]
      %v298 = vld [vmem:[%s273 + $0x18] sm:$0x1]
      %v299 = vld [vmem:[%s273] sm:$0xc0]
      %v300 = vld [vmem:[%s273 + $0x8] sm:$0xc0]
      %v301 = vld [vmem:[%s273 + $0x10] sm:$0xf]
      %v302 = vlaneseq
      %v303 = vand.u32 %v302, 127
      %v304 = vcvt.s32.f32 %v303
      %v305 = vadd.f32 %v304, 0.5
      %v306 = vmul.f32 %v305, 0.125
      %v307 = vfloor.f32 %v306
      %v308 = vmul.f32 %v307, 8.0
      %v309 = vsub.f32 %v304, %v308
      %vm310 = vcmp.lt.f32.partialorder %v309, 0.5
      %vm311 = vcmp.lt.f32.partialorder %v307, 0.5
      %vm312 = vmor %vm311, %vm310
      %vm317 = vcmask 1044480
      %v318 = vrot.slane %v295, 3
      %v319 = vrot.slane %v297, 3
      %v320 = vsel %vm317, %v318, %v319
      %v321 = vrot.slane %v296, 3
      %v322 = vrot.slane %v298, 3
      %v323 = vsel %vm317, %v321, %v322
      %324 = vrot.lane.b32.xlu0 %v320, 1
      %v325 = vpop.permute.xlu0 %324
      %326 = vrot.lane.b32.xlu0 %v323, 1
      %v327 = vpop.permute.xlu0 %326
      %vm328 = vcmask 7168
      %v329 = vsel %vm328, %v325, %v327
      %vm330 = vcmask 48128
      %v332 = vsel %vm330, %v281, 0
      %v335 = vsel %vm330, %v282, 0
      %vm337 = vcmask 1045504
      %v338 = vsel %vm337, %v329, 0
      %340 = vmatpush.msra.mxu0 0.0
      %341 = vmatpush.msra.mxu0 0.0
      %342 = vmatpush.msra.mxu0 0.0
      %343 = vmatpush.msra.mxu0 0.0
      %344 = vmatpush.msra.mxu0 0.0
      %345 = vmatpush.msra.mxu0 0.0
      %346 = vmatpush.msra.mxu0 0.0
      %347 = vmatpush.msra.mxu0 0.0
      %348 = vmatpush.msra.mxu0 0.0
      %349 = vmatpush.msra.mxu0 0.0
      %350 = vmatpush.msra.mxu0 0.0
      %351 = vmatpush.msra.mxu0 0.0
      %352 = vmatpush.msra.mxu0 0.0
      %353 = vmatpush.msra.mxu0 0.0
      %354 = vmatpush.msra.mxu0 0.0
      %355 = vmatpush.msra.mxu0 %v338
      %356 = vmatmul.f32.gmra.mxu0 %v332
      %v357 = vpop.f32.mrf.mxu0
      %v358 = vadd.f32 0.0, %v357
      %359 = vmatmul.f32.gmra.mxu0 %v335
      %v360 = vpop.f32.mrf.mxu0
      %v361 = vadd.f32 0.0, %v360
      %362 = vdwg.mxu0
      %v363 = vsel %vm310, 1, 0
      %vm364 = vcmp.eq.s32.totalorder %v363, 1
      %v365 = vsel %vm364, 0.0, %v358
      %v366 = vsel %vm364, 0.0, %v361
      %vm367 = vcmask 97280
      %v369 = vsel %vm367, %v279, 0
      %v372 = vsel %vm367, %v280, 0
      %vm374 = vcmask 1043456
      %v376 = vsel %vm374, %v294, 0
      %378 = vmatpush.msra.mxu0 0.0
      %379 = vmatpush.msra.mxu0 0.0
      %380 = vmatpush.msra.mxu0 0.0
      %381 = vmatpush.msra.mxu0 0.0
      %382 = vmatpush.msra.mxu0 0.0
      %383 = vmatpush.msra.mxu0 0.0
      %384 = vmatpush.msra.mxu0 0.0
      %385 = vmatpush.msra.mxu0 0.0
      %386 = vmatpush.msra.mxu0 0.0
      %387 = vmatpush.msra.mxu0 0.0
      %388 = vmatpush.msra.mxu0 0.0
      %389 = vmatpush.msra.mxu0 0.0
      %390 = vmatpush.msra.mxu0 0.0
      %391 = vmatpush.msra.mxu0 0.0
      %392 = vmatpush.msra.mxu0 %v376
      %393 = vmatpush.msra.mxu0 %v293
      %394 = vmatmul.f32.gmra.mxu0 %v369
      %v395 = vpop.f32.mrf.mxu0
      %v396 = vadd.f32 %v365, %v395
      %397 = vmatmul.f32.gmra.mxu0 %v372
      %v398 = vpop.f32.mrf.mxu0
      %v399 = vadd.f32 %v366, %v398
      %400 = vdwg.mxu0
      %vm404 = vcmask 1041408
      %v405 = vrot.slane %v299, 6
      %v406 = vrot.slane %v301, 6
      %v407 = vsel %vm404, %v405, %v406
      %v408 = vrot.slane %v300, 6
      %v409 = vrot.slane %v294, 6
      %v410 = vsel %vm404, %v408, %v409
      %411 = vrot.lane.b32.xlu0 %v407, 8
      %v412 = vpop.permute.xlu0 %411
      %413 = vrot.lane.b32.xlu0 %v410, 8
      %v414 = vpop.permute.xlu0 %413
      %vm415 = vcmask 64512
      %v416 = vsel %vm415, %v412, %v414
      %v418 = vsel %vm330, %v283, 0
      %v421 = vsel %vm330, %v284, 0
      %v423 = vsel %vm337, %v416, 0
      %425 = vmatpush.msra.mxu0 0.0
      %426 = vmatpush.msra.mxu0 0.0
      %427 = vmatpush.msra.mxu0 0.0
      %428 = vmatpush.msra.mxu0 0.0
      %429 = vmatpush.msra.mxu0 0.0
      %430 = vmatpush.msra.mxu0 0.0
      %431 = vmatpush.msra.mxu0 0.0
      %432 = vmatpush.msra.mxu0 0.0
      %433 = vmatpush.msra.mxu0 0.0
      %434 = vmatpush.msra.mxu0 0.0
      %435 = vmatpush.msra.mxu0 0.0
      %436 = vmatpush.msra.mxu0 0.0
      %437 = vmatpush.msra.mxu0 0.0
      %438 = vmatpush.msra.mxu0 0.0
      %439 = vmatpush.msra.mxu0 0.0
      %440 = vmatpush.msra.mxu0 %v423
      %441 = vmatmul.f32.gmra.mxu0 %v418
      %v442 = vpop.f32.mrf.mxu0
      %v443 = vadd.f32 0.0, %v442
      %444 = vmatmul.f32.gmra.mxu0 %v421
      %v445 = vpop.f32.mrf.mxu0
      %v446 = vadd.f32 0.0, %v445
      %447 = vdwg.mxu0
      %v448 = vsel %vm311, 1, 0
      %vm449 = vcmp.eq.s32.totalorder %v448, 1
      %v450 = vsel %vm449, 0.0, %v443
      %v451 = vsel %vm449, 0.0, %v446
      %v452 = vadd.f32 %v396, %v450
      %v453 = vadd.f32 %v399, %v451
      %v454 = vrot.slane %v297, 6
      %v455 = vsel %vm404, %v405, %v454
      %v456 = vrot.slane %v298, 6
      %v457 = vsel %vm404, %v408, %v456
      %458 = vrot.lane.b32.xlu0 %v455, 9
      %v459 = vpop.permute.xlu0 %458
      %460 = vrot.lane.b32.xlu0 %v457, 9
      %v461 = vpop.permute.xlu0 %460
      %vm462 = vcmask 72704
      %v463 = vsel %vm462, %v459, %v461
      %vm464 = vcmask 23552
      %v466 = vsel %vm464, %v285, 0
      %v469 = vsel %vm464, %v286, 0
      %vm471 = vcmask 1042432
      %v472 = vsel %vm471, %v463, 0
      %474 = vmatpush.msra.mxu0 0.0
      %475 = vmatpush.msra.mxu0 0.0
      %476 = vmatpush.msra.mxu0 0.0
      %477 = vmatpush.msra.mxu0 0.0
      %478 = vmatpush.msra.mxu0 0.0
      %479 = vmatpush.msra.mxu0 0.0
      %480 = vmatpush.msra.mxu0 0.0
      %481 = vmatpush.msra.mxu0 0.0
      %482 = vmatpush.msra.mxu0 0.0
      %483 = vmatpush.msra.mxu0 0.0
      %484 = vmatpush.msra.mxu0 0.0
      %485 = vmatpush.msra.mxu0 0.0
      %486 = vmatpush.msra.mxu0 0.0
      %487 = vmatpush.msra.mxu0 0.0
      %488 = vmatpush.msra.mxu0 0.0
      %489 = vmatpush.msra.mxu0 %v472
      %490 = vmatmul.f32.gmra.mxu0 %v466
      %v491 = vpop.f32.mrf.mxu0
      %v492 = vadd.f32 0.0, %v491
      %493 = vmatmul.f32.gmra.mxu0 %v469
      %v494 = vpop.f32.mrf.mxu0
      %v495 = vadd.f32 0.0, %v494
      %496 = vdwg.mxu0
      %v497 = vsel %vm312, 1, 0
      %vm498 = vcmp.eq.s32.totalorder %v497, 1
      %v499 = vsel %vm498, 0.0, %v492
      %v500 = vsel %vm498, 0.0, %v495
      %v501 = vadd.f32 %v452, %v499
      %v502 = vadd.f32 %v453, %v500
      %v504 = vrot.slane %v293, 3
      %v506 = vmax.f32 %v293, %v504
      %v507 = vrot.slane %v294, 3
      %v509 = vmax.f32 %v293, %v507
      %v510 = vmax.f32 %v294, %v507
      %v513 = vrot.slane %v509, 6
      %v514 = vrot.slane %v510, 6
      %v515 = vsel %vm404, %v513, %v514
      %v517 = vmax.f32 %v506, %v515
      %v520 = vmax.f32 %v295, %v320
      %v521 = vmax.f32 %v296, %v323
      %v522 = vrot.slane %v301, 3
      %v524 = vmax.f32 %v299, %v522
      %v525 = vmax.f32 %v300, %v507
      %v526 = vmax.f32 %v301, %v522
      %v529 = vrot.slane %v520, 3
      %v530 = vrot.slane %v521, 3
      %531 = vrot.lane.b32.xlu0 %v529, 1
      %v532 = vpop.permute.xlu0 %531
      %533 = vrot.lane.b32.xlu0 %v530, 1
      %v534 = vpop.permute.xlu0 %533
      %v535 = vsel %vm328, %v532, %v534
      %v537 = vsel %vm364, -3.4028235e+38, %v535
      %v538 = vmax.f32 %v517, %v537
      %v542 = vrot.slane %v524, 6
      %v543 = vrot.slane %v526, 6
      %v544 = vsel %vm404, %v542, %v543
      %v545 = vrot.slane %v525, 6
      %v546 = vsel %vm404, %v545, %v514
      %547 = vrot.lane.b32.xlu0 %v544, 8
      %v548 = vpop.permute.xlu0 %547
      %549 = vrot.lane.b32.xlu0 %v546, 8
      %v550 = vpop.permute.xlu0 %549
      %v551 = vsel %vm415, %v548, %v550
      %v553 = vsel %vm449, -3.4028235e+38, %v551
      %v554 = vmax.f32 %v538, %v553
      %v556 = vsel %vm498, -3.4028235e+38, %v463
      %v557 = vmax.f32 %v554, %v556
      %559 = vset.pattern.permute.xlu0 0
      %560 = vperm.xlu0 %559, %v287
      %v561 = vpop.permute.xlu0 %560
      %564 = vset.pattern.permute.xlu0 0
      %565 = vperm.xlu0 %564, %v288
      %v566 = vpop.permute.xlu0 %565
      %v568 = vmul.f32 %v501, %v561
      %v569 = vmul.f32 %v502, %v566
      %571 = vset.pattern.permute.xlu0 0
      %572 = vperm.xlu0 %571, %v289
      %v573 = vpop.permute.xlu0 %572
      %576 = vset.pattern.permute.xlu0 0
      %577 = vperm.xlu0 %576, %v290
      %v578 = vpop.permute.xlu0 %577
      %v580 = vadd.f32 %v568, %v573
      %v581 = vadd.f32 %v569, %v578
      %v582 = vmax.f32 %v580, 0.0
      %v583 = vmax.f32 %v581, 0.0
      %584 = vst [vmem:[%s278] sm:$0xff] %v582
      %585 = vst [vmem:[%s278 + $0x8] sm:$0x1f] %v583
      %587 = vset.pattern.permute.xlu0 0
      %588 = vperm.xlu0 %587, %v291
      %v589 = vpop.permute.xlu0 %588
      %v591 = vmul.f32 %v557, %v589
      %593 = vset.pattern.permute.xlu0 0
      %594 = vperm.xlu0 %593, %v292
      %v595 = vpop.permute.xlu0 %594
      %v597 = vadd.f32 %v591, %v595
      %v598 = vmax.f32 %v597, 0.0
      %599 = vst [vmem:[%s278 + $0xd] sm:$0x7] %v598
      %p600 = scmp.lt.s32.totalorder %s18, 1
      %s601 = scalar_select %p600, %s18, 1
      %s602 = smul.addr %s601, 2
      %s603 = smul.addr %s602, 8
      %s604 = scalar_lea.vmem %s7, %s603
      // Predicated region
      $region49: #{initial_block.3} parent=47 // pred_check
        %p605 = pneg %p188
      $region50: #{initial_block.3} parent=47 // pred_check_branch
        %607 = sbr.rel (%p605) target = $region52
      $region51: #{initial_block.3} parent=47 // pred_region
        _
      $region52: #{initial_block.3} parent=47 // pred_fallthru
        _
    $region48: #{initial_block.3} parent=5 // pred_fallthru
      _
    %p608 = scmp.le.s32.totalorder 2, %s13
    // Predicated region
    $region53: #{initial_block.3} parent=5 // pred_check
      %p609 = pneg %p608
    $region54: #{initial_block.3} parent=5 // pred_check_branch
      %611 = sbr.rel (%p609) target = $region56
    $region55: #{initial_block.3} parent=5 // pred_region
      %s612 = ssub.s32 %s13, 2
      // Predicated region
      $region57: #{initial_block.3} parent=55 // pred_check
        %p613 = pneg %p194
      $region58: #{initial_block.3} parent=55 // pred_check_branch
        %615 = sbr.rel (%p613) target = $region60
      $region59: #{initial_block.3} parent=55 // pred_region
        %p616 = scmp.lt.s32.totalorder %s19, 1
        %s617 = scalar_select %p616, %s19, 1
        %s618 = smul.addr %s617, 2
        %s619 = smul.addr %s618, 8
        %s620 = scalar_lea.vmem %s7, %s619
      $region60: #{initial_block.3} parent=55 // pred_fallthru
        _
    $region56: #{initial_block.3} parent=5 // pred_fallthru
      _
  $region6: #{initial_block.3} parent=0 // loop_footer
    %s17 = sadd.s32 1, %s13
  $region7: #{initial_block.3} parent=0 // loop_footer_branch
    %12 = sbr.rel target = $region3
  $region8: #{initial_block.3} parent=0 // loop_exit
    _

// kernel: initial_block.2
$region0: #{initial_block.2}
  #allocation0 [shape = 'u32[]', space=smem, size = 0x4, offset = 0x4, fixed_abs, tag = 'smem constant byte address 0x4 - core index']
  #allocation1 [shape = 'u32[72,128]{1,0:T(1,128)}', space=vmem, size = 0x9000, scoped, tag = 'internal scratch']
  %s0 = inlined_call_operand.vmem [shape: f32[2,12,256], index: 0, kind: input, shape index: {}]
  %s1 = inlined_call_operand.vmem [shape: f32[13,12], index: 1, kind: input, shape index: {}]
  %s2 = inlined_call_operand.vmem [shape: f32[13,6], index: 2, kind: input, shape index: {}]
  %s3 = inlined_call_operand.vmem [shape: f32[13,6], index: 3, kind: input, shape index: {}]
  %s4 = inlined_call_operand.vmem [shape: f32[13,3], index: 4, kind: input, shape index: {}]
  %s5 = inlined_call_operand.vmem [shape: f32[2,16,1], index: 5, kind: output, shape index: {0}]
  %s6 = inlined_call_operand.vmem [shape: f32[2,16,1], index: 6, kind: output, shape index: {1}]
  %7 = xla_tuple %s5, %s6
  %s8 = sld [smem:[#allocation0]]
  $region61: #{initial_block.2} parent=0
    _
  %s10 = ssub.s32 1, %s8
  %s11 = scalar_select 0, %s10, %s8
  loop: start=0, step=1, limit=4
  $region2: #{initial_block.2} parent=0 // loop_pre_header
    _
  $region3: #{initial_block.2} parent=0 // loop_header
    %s13 = sphi 0, %s17
    %p14 = scmp.ge.s32.totalorder %s13, 4
    %s23 = sphi 0, %s25
    %s26 = sphi 0, %s23
    %s27 = sphi 0, %s26
    %s43 = sphi 0, %s27
    %s47 = sphi 0, %s47
    %s49 = sphi 0, %s47
    %s50 = sphi 0, %s49
    %s64 = sphi 0, %s50
    %s68 = sphi 0, %s68
    %s70 = sphi 0, %s68
    %s71 = sphi 0, %s70
    %s85 = sphi 0, %s71
    %s89 = sphi 0, %s89
    %s91 = sphi 0, %s89
    %s92 = sphi 0, %s91
    %s106 = sphi 0, %s92
    %s110 = sphi 0, %s110
    %s112 = sphi 0, %s110
    %s113 = sphi 0, %s112
    %s127 = sphi 0, %s113
    %s133 = sphi 0, %s135
    %s136 = sphi 0, %s133
    %s137 = sphi 0, %s136
    %s153 = sphi 0, %s137
    %s159 = sphi 0, %s161
    %s162 = sphi 0, %s159
    %s163 = sphi 0, %s162
    %s179 = sphi 0, %s163
  $region4: #{initial_block.2} parent=0 // loop_header_branch
    %16 = sbr.rel (%p14) target = $region8
  $region5: #{initial_block.2} parent=0 // loop_body
    %s18 = ssub.s32 %s13, 1
    %s19 = ssub.s32 %s13, 2
    %s20 = sadd.s32 %s13, 1
    %s21 = ssub.s32 %s13, %s20
    %p22 = scmp.eq.s32.totalorder %s21, 0
    %s24 = sadd.s32 %s23, 1
    %s25 = scalar_select %p22, %s23, %s24
    %p28 = pneg %p22
    %p29 = scmp.eq.s32.totalorder %s13, 1
    %p30 = por %p28, %p29
    %p31 = scmp.ne.s32.totalorder %s23, %s26
    %p32 = scmp.eq.s32.totalorder %s13, 0
    %p33 = por %p31, %p32
    %p34 = scmp.ne.s32.totalorder %s23, %s26
    %p35 = scmp.eq.s32.totalorder %s18, 1
    %p36 = por %p34, %p35
    %p37 = scmp.ne.s32.totalorder %s26, %s27
    %p38 = scmp.eq.s32.totalorder %s18, 0
    %p39 = por %p37, %p38
    %p40 = scmp.ne.s32.totalorder %s26, %s27
    %p41 = scmp.eq.s32.totalorder %s19, 1
    %p42 = por %p40, %p41
    %p44 = scmp.ne.s32.totalorder %s27, %s43
    %p45 = scmp.eq.s32.totalorder %s19, 0
    %p46 = por %p44, %p45
    %s48 = sadd.s32 %s47, 1
    %p51 = scmp.eq.s32.totalorder %s13, 1
    %p52 = scmp.ne.s32.totalorder %s47, %s49
    %p53 = scmp.eq.s32.totalorder %s13, 0
    %p54 = por %p52, %p53
    %p55 = scmp.ne.s32.totalorder %s47, %s49
    %p56 = scmp.eq.s32.totalorder %s18, 1
    %p57 = por %p55, %p56
    %p58 = scmp.ne.s32.totalorder %s49, %s50
    %p59 = scmp.eq.s32.totalorder %s18, 0
    %p60 = por %p58, %p59
    %p61 = scmp.ne.s32.totalorder %s49, %s50
    %p62 = scmp.eq.s32.totalorder %s19, 1
    %p63 = por %p61, %p62
    %p65 = scmp.ne.s32.totalorder %s50, %s64
    %p66 = scmp.eq.s32.totalorder %s19, 0
    %p67 = por %p65, %p66
    %s69 = sadd.s32 %s68, 1
    %p72 = scmp.eq.s32.totalorder %s13, 1
    %p73 = scmp.ne.s32.totalorder %s68, %s70
    %p74 = scmp.eq.s32.totalorder %s13, 0
    %p75 = por %p73, %p74
    %p76 = scmp.ne.s32.totalorder %s68, %s70
    %p77 = scmp.eq.s32.totalorder %s18, 1
    %p78 = por %p76, %p77
    %p79 = scmp.ne.s32.totalorder %s70, %s71
    %p80 = scmp.eq.s32.totalorder %s18, 0
    %p81 = por %p79, %p80
    %p82 = scmp.ne.s32.totalorder %s70, %s71
    %p83 = scmp.eq.s32.totalorder %s19, 1
    %p84 = por %p82, %p83
    %p86 = scmp.ne.s32.totalorder %s71, %s85
    %p87 = scmp.eq.s32.totalorder %s19, 0
    %p88 = por %p86, %p87
    %s90 = sadd.s32 %s89, 1
    %p93 = scmp.eq.s32.totalorder %s13, 1
    %p94 = scmp.ne.s32.totalorder %s89, %s91
    %p95 = scmp.eq.s32.totalorder %s13, 0
    %p96 = por %p94, %p95
    %p97 = scmp.ne.s32.totalorder %s89, %s91
    %p98 = scmp.eq.s32.totalorder %s18, 1
    %p99 = por %p97, %p98
    %p100 = scmp.ne.s32.totalorder %s91, %s92
    %p101 = scmp.eq.s32.totalorder %s18, 0
    %p102 = por %p100, %p101
    %p103 = scmp.ne.s32.totalorder %s91, %s92
    %p104 = scmp.eq.s32.totalorder %s19, 1
    %p105 = por %p103, %p104
    %p107 = scmp.ne.s32.totalorder %s92, %s106
    %p108 = scmp.eq.s32.totalorder %s19, 0
    %p109 = por %p107, %p108
    %s111 = sadd.s32 %s110, 1
    %p114 = scmp.eq.s32.totalorder %s13, 1
    %p115 = scmp.ne.s32.totalorder %s110, %s112
    %p116 = scmp.eq.s32.totalorder %s13, 0
    %p117 = por %p115, %p116
    %p118 = scmp.ne.s32.totalorder %s110, %s112
    %p119 = scmp.eq.s32.totalorder %s18, 1
    %p120 = por %p118, %p119
    %p121 = scmp.ne.s32.totalorder %s112, %s113
    %p122 = scmp.eq.s32.totalorder %s18, 0
    %p123 = por %p121, %p122
    %p124 = scmp.ne.s32.totalorder %s112, %s113
    %p125 = scmp.eq.s32.totalorder %s19, 1
    %p126 = por %p124, %p125
    %p128 = scmp.ne.s32.totalorder %s113, %s127
    %p129 = scmp.eq.s32.totalorder %s19, 0
    %p130 = por %p128, %p129
    %s131 = ssub.s32 %s13, %s20
    %p132 = scmp.eq.s32.totalorder %s131, 0
    %s134 = sadd.s32 %s133, 1
    %s135 = scalar_select %p132, %s133, %s134
    %p138 = pneg %p132
    %p139 = scmp.eq.s32.totalorder %s13, 1
    %p140 = por %p138, %p139
    %p141 = scmp.ne.s32.totalorder %s133, %s136
    %p142 = scmp.eq.s32.totalorder %s13, 0
    %p143 = por %p141, %p142
    %p144 = scmp.ne.s32.totalorder %s133, %s136
    %p145 = scmp.eq.s32.totalorder %s18, 1
    %p146 = por %p144, %p145
    %p147 = scmp.ne.s32.totalorder %s136, %s137
    %p148 = scmp.eq.s32.totalorder %s18, 0
    %p149 = por %p147, %p148
    %p150 = scmp.ne.s32.totalorder %s136, %s137
    %p151 = scmp.eq.s32.totalorder %s19, 1
    %p152 = por %p150, %p151
    %p154 = scmp.ne.s32.totalorder %s137, %s153
    %p155 = scmp.eq.s32.totalorder %s19, 0
    %p156 = por %p154, %p155
    %s157 = ssub.s32 %s13, %s20
    %p158 = scmp.eq.s32.totalorder %s157, 0
    %s160 = sadd.s32 %s159, 1
    %s161 = scalar_select %p158, %s159, %s160
    %p164 = pneg %p158
    %p165 = scmp.eq.s32.totalorder %s13, 1
    %p166 = por %p164, %p165
    %p167 = scmp.ne.s32.totalorder %s159, %s162
    %p168 = scmp.eq.s32.totalorder %s13, 0
    %p169 = por %p167, %p168
    %p170 = scmp.ne.s32.totalorder %s159, %s162
    %p171 = scmp.eq.s32.totalorder %s18, 1
    %p172 = por %p170, %p171
    %p173 = scmp.ne.s32.totalorder %s162, %s163
    %p174 = scmp.eq.s32.totalorder %s18, 0
    %p175 = por %p173, %p174
    %p176 = scmp.ne.s32.totalorder %s162, %s163
    %p177 = scmp.eq.s32.totalorder %s19, 1
    %p178 = por %p176, %p177
    %p180 = scmp.ne.s32.totalorder %s163, %s179
    %p181 = scmp.eq.s32.totalorder %s19, 0
    %p182 = por %p180, %p181
    %p183 = scmp.le.s32.totalorder 1, %s13
    %p184 = scmp.lt.s32.totalorder %s13, 3
    %p185 = pnand %p183, %p184
    %p186 = pneg %p185
    // Predicated region
    $region9: #{initial_block.2} parent=5 // pred_check
      _
    $region10: #{initial_block.2} parent=5 // pred_check_branch
      %188 = sbr.rel (%p185) target = $region12
    $region11: #{initial_block.2} parent=5 // pred_region
      %s189 = ssub.s32 %s13, 1
      // Predicated region
      $region13: #{initial_block.2} parent=11 // pred_check
        %p190 = pneg %p60
      $region14: #{initial_block.2} parent=11 // pred_check_branch
        %192 = sbr.rel (%p190) target = $region16
      $region15: #{initial_block.2} parent=11 // pred_region
        _
      $region16: #{initial_block.2} parent=11 // pred_fallthru
        _
      // Predicated region
      $region17: #{initial_block.2} parent=11 // pred_check
        %p193 = pneg %p81
      $region18: #{initial_block.2} parent=11 // pred_check_branch
        %195 = sbr.rel (%p193) target = $region20
      $region19: #{initial_block.2} parent=11 // pred_region
        _
      $region20: #{initial_block.2} parent=11 // pred_fallthru
        _
      // Predicated region
      $region21: #{initial_block.2} parent=11 // pred_check
        %p196 = pneg %p102
      $region22: #{initial_block.2} parent=11 // pred_check_branch
        %198 = sbr.rel (%p196) target = $region24
      $region23: #{initial_block.2} parent=11 // pred_region
        _
      $region24: #{initial_block.2} parent=11 // pred_fallthru
        _
      // Predicated region
      $region25: #{initial_block.2} parent=11 // pred_check
        %p199 = pneg %p123
      $region26: #{initial_block.2} parent=11 // pred_check_branch
        %201 = sbr.rel (%p199) target = $region28
      $region27: #{initial_block.2} parent=11 // pred_region
        _
      $region28: #{initial_block.2} parent=11 // pred_fallthru
        _
    $region12: #{initial_block.2} parent=5 // pred_fallthru
      _
    %p202 = scmp.lt.s32.totalorder %s13, 2
    // Predicated region
    $region29: #{initial_block.2} parent=5 // pred_check
      %p203 = pneg %p202
    $region30: #{initial_block.2} parent=5 // pred_check_branch
      %205 = sbr.rel (%p203) target = $region32
    $region31: #{initial_block.2} parent=5 // pred_region
      // Predicated region
      $region33: #{initial_block.2} parent=31 // pred_check
        %p206 = pneg %p33
      $region34: #{initial_block.2} parent=31 // pred_check_branch
        %208 = sbr.rel (%p206) target = $region36
      $region35: #{initial_block.2} parent=31 // pred_region
        %p209 = scmp.lt.s32.totalorder %s13, 1
        %s210 = scalar_select %p209, %s13, 1
        %s211 = smul.addr %s210, 4
        %s212 = smul.addr %s211, 8
        %s213 = scalar_lea.vmem %s0, %s212
      $region36: #{initial_block.2} parent=31 // pred_fallthru
        _
    $region32: #{initial_block.2} parent=5 // pred_fallthru
      _
    %p214 = scmp.le.s32.totalorder 1, %s13
    %p215 = scmp.lt.s32.totalorder %s13, 3
    %p216 = pnand %p214, %p215
    %p217 = pneg %p216
    // Predicated region
    $region37: #{initial_block.2} parent=5 // pred_check
      _
    $region38: #{initial_block.2} parent=5 // pred_check_branch
      %219 = sbr.rel (%p216) target = $region40
    $region39: #{initial_block.2} parent=5 // pred_region
      %s220 = ssub.s32 %s13, 1
      %p221 = scmp.lt.s32.totalorder %s18, 1
      %s222 = scalar_select %p221, %s18, 1
      %s223 = smul.addr %s222, 4
      %s224 = smul.addr %s223, 8
      %s225 = scalar_lea.vmem %s0, %s224
      %p226 = pneg %p39
      %p227 = pneg %p36
      %p228 = pneg %p60
      %p229 = pneg %p57
      %p230 = pneg %p81
      %p231 = pneg %p78
      %p232 = pneg %p102
      %p233 = pneg %p99
      %p234 = pneg %p123
      %p235 = pneg %p120
      %p236 = pneg %p149
      %p237 = pneg %p146
      %p238 = scmp.lt.s32.totalorder %s18, 1
      %s239 = scalar_select %p238, %s18, 1
      %s240 = smul.addr %s239, 2
      %s241 = smul.addr %s240, 8
      %s242 = scalar_lea.vmem %s5, %s241
      %p243 = pneg %p175
      %p244 = pneg %p172
      %p245 = scmp.lt.s32.totalorder %s18, 1
      %s246 = scalar_select %p245, %s18, 1
      %s247 = smul.addr %s246, 2
      %s248 = smul.addr %s247, 8
      %s249 = scalar_lea.vmem %s6, %s248
      %p250 = scmp.lt.s32.totalorder %s18, 1
      %s251 = scalar_select %p250, %s18, 1
      %s252 = smul.addr %s251, 4
      %s253 = smul.addr %s252, 8
      %s254 = scalar_lea.vmem %s0, %s253
      %p255 = scmp.lt.s32.totalorder %s18, 1
      %s256 = scalar_select %p255, %s18, 1
      %s257 = smul.addr %s256, 2
      %s258 = smul.addr %s257, 8
      %s259 = scalar_lea.vmem %s5, %s258
      %p260 = scmp.lt.s32.totalorder %s18, 1
      %s261 = scalar_select %p260, %s18, 1
      %s262 = smul.addr %s261, 2
      %s263 = smul.addr %s262, 8
      %s264 = scalar_lea.vmem %s6, %s263
      %v265 = vld [vmem:[%s1] sm:$0xff]
      %v266 = vld [vmem:[%s1 + $0x8] sm:$0x1f]
      %v267 = vld [vmem:[%s2] sm:$0xff]
      %v268 = vld [vmem:[%s2 + $0x8] sm:$0x1f]
      %v269 = vld [vmem:[%s3] sm:$0xff]
      %v270 = vld [vmem:[%s3 + $0x8] sm:$0x1f]
      %v271 = vld [vmem:[%s4] sm:$0xff]
      %v272 = vld [vmem:[%s4 + $0x8] sm:$0x1f]
      %v273 = vld [vmem:[%s254 + $0x8] sm:$0xff]
      %v274 = vld [vmem:[%s254 + $0x18] sm:$0xf]
      %v275 = vld [vmem:[%s254] sm:$0xf8]
      %v276 = vld [vmem:[%s254 + $0x8] sm:$0xf8]
      %v277 = vld [vmem:[%s254 + $0x10] sm:$0x1]
      %v278 = vld [vmem:[%s254 + $0x18] sm:$0x1]
      %v279 = vld [vmem:[%s254] sm:$0xc0]
      %v280 = vld [vmem:[%s254 + $0x8] sm:$0xc0]
      %v281 = vld [vmem:[%s254 + $0x10] sm:$0xf]
      %v282 = vlaneseq
      %v283 = vand.u32 %v282, 127
      %v284 = vcvt.s32.f32 %v283
      %v285 = vadd.f32 %v284, 0.5
      %v286 = vmul.f32 %v285, 0.125
      %v287 = vfloor.f32 %v286
      %v288 = vmul.f32 %v287, 8.0
      %v289 = vsub.f32 %v284, %v288
      %vm290 = vcmp.lt.f32.partialorder %v289, 0.5
      %vm291 = vcmp.lt.f32.partialorder %v287, 0.5
      %vm292 = vmor %vm291, %vm290
      %vm293 = vcmp.lt.s32.totalorder %v283, 64
      %vm298 = vcmask 1044480
      %v299 = vrot.slane %v275, 3
      %v300 = vrot.slane %v277, 3
      %v301 = vsel %vm298, %v299, %v300
      %v302 = vrot.slane %v276, 3
      %v303 = vrot.slane %v278, 3
      %v304 = vsel %vm298, %v302, %v303
      %305 = vrot.lane.b32.xlu0 %v301, 1
      %v306 = vpop.permute.xlu0 %305
      %307 = vrot.lane.b32.xlu0 %v304, 1
      %v308 = vpop.permute.xlu0 %307
      %vm309 = vcmask 7168
      %v310 = vsel %vm309, %v306, %v308
      %vm311 = vcmask 48128
      %v313 = vsel %vm311, %v267, 0
      %v316 = vsel %vm311, %v268, 0
      %vm318 = vcmask 1045504
      %v319 = vsel %vm318, %v310, 0
      %321 = vmatpush.msra.mxu0 0.0
      %322 = vmatpush.msra.mxu0 0.0
      %323 = vmatpush.msra.mxu0 0.0
      %324 = vmatpush.msra.mxu0 0.0
      %325 = vmatpush.msra.mxu0 0.0
      %326 = vmatpush.msra.mxu0 0.0
      %327 = vmatpush.msra.mxu0 0.0
      %328 = vmatpush.msra.mxu0 0.0
      %329 = vmatpush.msra.mxu0 0.0
      %330 = vmatpush.msra.mxu0 0.0
      %331 = vmatpush.msra.mxu0 0.0
      %332 = vmatpush.msra.mxu0 0.0
      %333 = vmatpush.msra.mxu0 0.0
      %334 = vmatpush.msra.mxu0 0.0
      %335 = vmatpush.msra.mxu0 0.0
      %336 = vmatpush.msra.mxu0 %v319
      %337 = vmatmul.f32.gmra.mxu0 %v313
      %v338 = vpop.f32.mrf.mxu0
      %v339 = vadd.f32 0.0, %v338
      %340 = vmatmul.f32.gmra.mxu0 %v316
      %v341 = vpop.f32.mrf.mxu0
      %v342 = vadd.f32 0.0, %v341
      %343 = vdwg.mxu0
      %v344 = vsel %vm290, 1, 0
      %vm345 = vcmp.eq.s32.totalorder %v344, 1
      %v346 = vsel %vm345, 0.0, %v339
      %v347 = vsel %vm345, 0.0, %v342
      %vm348 = vcmask 97280
      %v350 = vsel %vm348, %v265, 0
      %v353 = vsel %vm348, %v266, 0
      %vm355 = vcmask 1043456
      %v357 = vsel %vm355, %v274, 0
      %359 = vmatpush.msra.mxu0 0.0
      %360 = vmatpush.msra.mxu0 0.0
      %361 = vmatpush.msra.mxu0 0.0
      %362 = vmatpush.msra.mxu0 0.0
      %363 = vmatpush.msra.mxu0 0.0
      %364 = vmatpush.msra.mxu0 0.0
      %365 = vmatpush.msra.mxu0 0.0
      %366 = vmatpush.msra.mxu0 0.0
      %367 = vmatpush.msra.mxu0 0.0
      %368 = vmatpush.msra.mxu0 0.0
      %369 = vmatpush.msra.mxu0 0.0
      %370 = vmatpush.msra.mxu0 0.0
      %371 = vmatpush.msra.mxu0 0.0
      %372 = vmatpush.msra.mxu0 0.0
      %373 = vmatpush.msra.mxu0 %v357
      %374 = vmatpush.msra.mxu0 %v273
      %375 = vmatmul.f32.gmra.mxu0 %v350
      %v376 = vpop.f32.mrf.mxu0
      %v377 = vadd.f32 %v346, %v376
      %378 = vmatmul.f32.gmra.mxu0 %v353
      %v379 = vpop.f32.mrf.mxu0
      %v380 = vadd.f32 %v347, %v379
      %381 = vdwg.mxu0
      %vm385 = vcmask 1041408
      %v386 = vrot.slane %v279, 6
      %v387 = vrot.slane %v281, 6
      %v388 = vsel %vm385, %v386, %v387
      %v389 = vrot.slane %v280, 6
      %v390 = vrot.slane %v274, 6
      %v391 = vsel %vm385, %v389, %v390
      %392 = vrot.lane.b32.xlu0 %v388, 8
      %v393 = vpop.permute.xlu0 %392
      %394 = vrot.lane.b32.xlu0 %v391, 8
      %v395 = vpop.permute.xlu0 %394
      %vm396 = vcmask 64512
      %v397 = vsel %vm396, %v393, %v395
      %v399 = vsel %vm311, %v269, 0
      %v402 = vsel %vm311, %v270, 0
      %v404 = vsel %vm318, %v397, 0
      %406 = vmatpush.msra.mxu0 0.0
      %407 = vmatpush.msra.mxu0 0.0
      %408 = vmatpush.msra.mxu0 0.0
      %409 = vmatpush.msra.mxu0 0.0
      %410 = vmatpush.msra.mxu0 0.0
      %411 = vmatpush.msra.mxu0 0.0
      %412 = vmatpush.msra.mxu0 0.0
      %413 = vmatpush.msra.mxu0 0.0
      %414 = vmatpush.msra.mxu0 0.0
      %415 = vmatpush.msra.mxu0 0.0
      %416 = vmatpush.msra.mxu0 0.0
      %417 = vmatpush.msra.mxu0 0.0
      %418 = vmatpush.msra.mxu0 0.0
      %419 = vmatpush.msra.mxu0 0.0
      %420 = vmatpush.msra.mxu0 0.0
      %421 = vmatpush.msra.mxu0 %v404
      %422 = vmatmul.f32.gmra.mxu0 %v399
      %v423 = vpop.f32.mrf.mxu0
      %v424 = vadd.f32 0.0, %v423
      %425 = vmatmul.f32.gmra.mxu0 %v402
      %v426 = vpop.f32.mrf.mxu0
      %v427 = vadd.f32 0.0, %v426
      %428 = vdwg.mxu0
      %v429 = vsel %vm291, 1, 0
      %vm430 = vcmp.eq.s32.totalorder %v429, 1
      %v431 = vsel %vm430, 0.0, %v424
      %v432 = vsel %vm430, 0.0, %v427
      %v433 = vadd.f32 %v377, %v431
      %v434 = vadd.f32 %v380, %v432
      %v435 = vrot.slane %v277, 6
      %v436 = vsel %vm385, %v386, %v435
      %v437 = vrot.slane %v278, 6
      %v438 = vsel %vm385, %v389, %v437
      %439 = vrot.lane.b32.xlu0 %v436, 9
      %v440 = vpop.permute.xlu0 %439
      %441 = vrot.lane.b32.xlu0 %v438, 9
      %v442 = vpop.permute.xlu0 %441
      %vm443 = vcmask 72704
      %v444 = vsel %vm443, %v440, %v442
      %vm445 = vcmask 23552
      %v447 = vsel %vm445, %v271, 0
      %v450 = vsel %vm445, %v272, 0
      %vm452 = vcmask 1042432
      %v453 = vsel %vm452, %v444, 0
      %455 = vmatpush.msra.mxu0 0.0
      %456 = vmatpush.msra.mxu0 0.0
      %457 = vmatpush.msra.mxu0 0.0
      %458 = vmatpush.msra.mxu0 0.0
      %459 = vmatpush.msra.mxu0 0.0
      %460 = vmatpush.msra.mxu0 0.0
      %461 = vmatpush.msra.mxu0 0.0
      %462 = vmatpush.msra.mxu0 0.0
      %463 = vmatpush.msra.mxu0 0.0
      %464 = vmatpush.msra.mxu0 0.0
      %465 = vmatpush.msra.mxu0 0.0
      %466 = vmatpush.msra.mxu0 0.0
      %467 = vmatpush.msra.mxu0 0.0
      %468 = vmatpush.msra.mxu0 0.0
      %469 = vmatpush.msra.mxu0 0.0
      %470 = vmatpush.msra.mxu0 %v453
      %471 = vmatmul.f32.gmra.mxu0 %v447
      %v472 = vpop.f32.mrf.mxu0
      %v473 = vadd.f32 0.0, %v472
      %474 = vmatmul.f32.gmra.mxu0 %v450
      %v475 = vpop.f32.mrf.mxu0
      %v476 = vadd.f32 0.0, %v475
      %477 = vdwg.mxu0
      %v478 = vsel %vm292, 1, 0
      %vm479 = vcmp.eq.s32.totalorder %v478, 1
      %v480 = vsel %vm479, 0.0, %v473
      %v481 = vsel %vm479, 0.0, %v476
      %v482 = vadd.f32 %v433, %v480
      %v483 = vadd.f32 %v434, %v481
      %v485 = vrot.slane %v273, 3
      %v487 = vmax.f32 %v273, %v485
      %v488 = vrot.slane %v274, 3
      %v490 = vmax.f32 %v273, %v488
      %v491 = vmax.f32 %v274, %v488
      %v494 = vrot.slane %v490, 6
      %v495 = vrot.slane %v491, 6
      %v496 = vsel %vm385, %v494, %v495
      %v498 = vmax.f32 %v487, %v496
      %v501 = vmax.f32 %v275, %v301
      %v502 = vmax.f32 %v276, %v304
      %v503 = vrot.slane %v281, 3
      %v505 = vmax.f32 %v279, %v503
      %v506 = vmax.f32 %v280, %v488
      %v507 = vmax.f32 %v281, %v503
      %v510 = vrot.slane %v501, 3
      %v511 = vrot.slane %v502, 3
      %512 = vrot.lane.b32.xlu0 %v510, 1
      %v513 = vpop.permute.xlu0 %512
      %514 = vrot.lane.b32.xlu0 %v511, 1
      %v515 = vpop.permute.xlu0 %514
      %v516 = vsel %vm309, %v513, %v515
      %v518 = vsel %vm345, -3.4028235e+38, %v516
      %v519 = vmax.f32 %v498, %v518
      %v523 = vrot.slane %v505, 6
      %v524 = vrot.slane %v507, 6
      %v525 = vsel %vm385, %v523, %v524
      %v526 = vrot.slane %v506, 6
      %v527 = vsel %vm385, %v526, %v495
      %528 = vrot.lane.b32.xlu0 %v525, 8
      %v529 = vpop.permute.xlu0 %528
      %530 = vrot.lane.b32.xlu0 %v527, 8
      %v531 = vpop.permute.xlu0 %530
      %v532 = vsel %vm396, %v529, %v531
      %v534 = vsel %vm430, -3.4028235e+38, %v532
      %v535 = vmax.f32 %v519, %v534
      %v537 = vsel %vm479, -3.4028235e+38, %v444
      %v538 = vmax.f32 %v535, %v537
      %v539 = vsel %vm293, 1, 0
      %vm540 = vcmp.eq.s32.totalorder %v539, 1
      %v541 = vsel %vm540, %v482, 0.0
      %v542 = vsel %vm540, %v483, 0.0
      %v543 = vsel %vm540, %v538, 0.0
      %544 = vadd.xlane.f32.xlu0 %v541
      %v545 = vpop.xlane.xlu0 %544
      %v546 = vsel %vm298, %v542, 0.0
      %547 = vadd.xlane.f32.xlu0 %v546
      %v548 = vpop.xlane.xlu0 %547
      %v549 = vadd.f32 %v545, 0.0
      %v550 = vadd.f32 %v548, 0.0
      %v551 = vsel %vm452, %v543, 0.0
      %552 = vadd.xlane.f32.xlu0 %v551
      %v553 = vpop.xlane.xlu0 %552
      %v554 = vadd.f32 %v553, 0.0
      %v555 = vmul.f32 %v541, %v541
      %v556 = vmul.f32 %v542, %v542
      %557 = vadd.xlane.f32.xlu0 %v555
      %v558 = vpop.xlane.xlu0 %557
      %v559 = vsel %vm298, %v556, 0.0
      %560 = vadd.xlane.f32.xlu0 %v559
      %v561 = vpop.xlane.xlu0 %560
      %v562 = vadd.f32 %v558, 0.0
      %v563 = vadd.f32 %v561, 0.0
      %v564 = vmul.f32 %v543, %v543
      %v565 = vsel %vm452, %v564, 0.0
      %566 = vadd.xlane.f32.xlu0 %v565
      %v567 = vpop.xlane.xlu0 %566
      %v568 = vadd.f32 %v567, 0.0
      %v570 = vrot.slane %v554, 3
      %v572 = vsel %vm298, %v550, %v570
      %573 = vst.msk [vmem:[%s259] sm:$0xff] %vm309, %v549
      %574 = vst.msk [vmem:[%s259 + $0x8] sm:$0xff] %vm309, %v572
      %v576 = vrot.slane %v568, 3
      %v578 = vsel %vm298, %v563, %v576
      %579 = vst.msk [vmem:[%s264] sm:$0xff] %vm309, %v562
      %580 = vst.msk [vmem:[%s264 + $0x8] sm:$0xff] %vm309, %v578
      %p581 = scmp.lt.s32.totalorder %s18, 1
      %s582 = scalar_select %p581, %s18, 1
      %s583 = smul.addr %s582, 2
      %s584 = smul.addr %s583, 8
      %s585 = scalar_lea.vmem %s5, %s584
      %p586 = scmp.lt.s32.totalorder %s18, 1
      %s587 = scalar_select %p586, %s18, 1
      %s588 = smul.addr %s587, 2
      %s589 = smul.addr %s588, 8
      %s590 = scalar_lea.vmem %s6, %s589
      // Predicated region
      $region41: #{initial_block.2} parent=39 // pred_check
        %p591 = pneg %p146
      $region42: #{initial_block.2} parent=39 // pred_check_branch
        %593 = sbr.rel (%p591) target = $region44
      $region43: #{initial_block.2} parent=39 // pred_region
        _
      $region44: #{initial_block.2} parent=39 // pred_fallthru
        _
      // Predicated region
      $region45: #{initial_block.2} parent=39 // pred_check
        %p594 = pneg %p172
      $region46: #{initial_block.2} parent=39 // pred_check_branch
        %596 = sbr.rel (%p594) target = $region48
      $region47: #{initial_block.2} parent=39 // pred_region
        _
      $region48: #{initial_block.2} parent=39 // pred_fallthru
        _
    $region40: #{initial_block.2} parent=5 // pred_fallthru
      _
    %p597 = scmp.le.s32.totalorder 2, %s13
    // Predicated region
    $region49: #{initial_block.2} parent=5 // pred_check
      %p598 = pneg %p597
    $region50: #{initial_block.2} parent=5 // pred_check_branch
      %600 = sbr.rel (%p598) target = $region52
    $region51: #{initial_block.2} parent=5 // pred_region
      %s601 = ssub.s32 %s13, 2
      // Predicated region
      $region53: #{initial_block.2} parent=51 // pred_check
        %p602 = pneg %p152
      $region54: #{initial_block.2} parent=51 // pred_check_branch
        %604 = sbr.rel (%p602) target = $region56
      $region55: #{initial_block.2} parent=51 // pred_region
        %p605 = scmp.lt.s32.totalorder %s19, 1
        %s606 = scalar_select %p605, %s19, 1
        %s607 = smul.addr %s606, 2
        %s608 = smul.addr %s607, 8
        %s609 = scalar_lea.vmem %s5, %s608
      $region56: #{initial_block.2} parent=51 // pred_fallthru
        _
      // Predicated region
      $region57: #{initial_block.2} parent=51 // pred_check
        %p610 = pneg %p178
      $region58: #{initial_block.2} parent=51 // pred_check_branch
        %612 = sbr.rel (%p610) target = $region60
      $region59: #{initial_block.2} parent=51 // pred_region
        %p613 = scmp.lt.s32.totalorder %s19, 1
        %s614 = scalar_select %p613, %s19, 1
        %s615 = smul.addr %s614, 2
        %s616 = smul.addr %s615, 8
        %s617 = scalar_lea.vmem %s6, %s616
      $region60: #{initial_block.2} parent=51 // pred_fallthru
        _
    $region52: #{initial_block.2} parent=5 // pred_fallthru
      _
  $region6: #{initial_block.2} parent=0 // loop_footer
    %s17 = sadd.s32 1, %s13
  $region7: #{initial_block.2} parent=0 // loop_footer_branch
    %12 = sbr.rel target = $region3
  $region8: #{initial_block.2} parent=0 // loop_exit
    _

</llo_original>
